<compile_context>
chip_gen: v6e
topology: v6e:2x2x1
jax: 0.10.0
libtpu: 0.0.40
codegen_flags: <defaults>
</compile_context>

<pallas_src>
import jax
import jax.numpy as jnp
from jax.experimental import pallas as pl
from jax.experimental.pallas import tpu as pltpu


_VMEM_LIMIT = 32 * 1024 * 1024          # safe on v5e/v6e/v7x
_COMPILER_PARAMS = pltpu.CompilerParams(
    dimension_semantics=("parallel",),
    vmem_limit_bytes=_VMEM_LIMIT,
)
# Pixel-tile (lane) width.  Multiple of 128.  For large inputs raise to 512-2048,
# keeping ~2*(9*Ci*2B + Co*(2B+4B))*TM bytes comfortably under the VMEM limit
# (halve the tile on v7x: 64 MiB physical VMEM).
_DEFAULT_TM = 256


def _round_up(x, m):
    return (x + m - 1) // m * m


def _pick_tile(m, tm_max):
    return min(tm_max, _round_up(m, 128))


# ---------------- Pallas kernels ----------------

def _gemm_bias_kernel(x_ref, w_ref, b_ref, o_ref):
    # x_ref: (K, TM)  bf16  pixels on lanes
    # w_ref: (N, K)   bf16  resident (constant index_map)
    # b_ref: (N, 1)   f32
    # o_ref: (N, TM)  f32   lane-dense store
    o_ref[...] = (
        jnp.dot(w_ref[...], x_ref[...], preferred_element_type=jnp.float32)
        + b_ref[...]
    )


def _conv_stats_kernel(t_ref, w_ref, y_ref, s_ref):
    # t_ref: (9*Ci, TM) bf16  im2col taps, pixels on lanes
    # w_ref: (Co, 9*Ci) bf16  resident
    # y_ref: (Co, TM)   bf16  pre-BN conv output (lane-dense)
    # s_ref: (Co, 128)  f32   per-tile partial BN stats: col 0 = sum, col 1 = sum(x^2)
    y = jnp.dot(w_ref[...], t_ref[...], preferred_element_type=jnp.float32)
    y_ref[...] = y.astype(y_ref.dtype)
    s_ref[...] = jnp.zeros_like(s_ref)
    s_ref[:, 0:1] = jnp.sum(y, axis=1, keepdims=True)
    s_ref[:, 1:2] = jnp.sum(y * y, axis=1, keepdims=True)


def _bn_relu_kernel(y_ref, a_ref, b_ref, o_ref):
    # y_ref: (Co, TM) bf16 ; a_ref/b_ref: (Co, 1) f32 folded BN scale/shift
    o_ref[...] = jnp.maximum(
        y_ref[...].astype(jnp.float32) * a_ref[...] + b_ref[...], 0.0
    ).astype(o_ref.dtype)


# ---------------- Pallas call wrappers (tiled over the pixel axis) ----------------

def _iwt_conv1x1_call(x_km, w4, b4, tm_max):
    # x_km: (4*Cin, M) bf16 ; w4: (4*Cmid, 4*Cin) bf16 ; b4: (4*Cmid, 1) f32
    k, m = x_km.shape
    n = w4.shape[0]
    tm = _pick_tile(m, tm_max)
    mp = _round_up(m, tm)
    xq = jnp.pad(x_km, ((0, 0), (0, mp - m)))
    y = pl.pallas_call(
        _gemm_bias_kernel,
        out_shape=jax.ShapeDtypeStruct((n, mp), jnp.float32),
        grid_spec=pltpu.PrefetchScalarGridSpec(
            num_scalar_prefetch=0,
            grid=(mp // tm,),
            in_specs=[
                pl.BlockSpec((k, tm), lambda i: (0, i)),
                pl.BlockSpec((n, k), lambda i: (0, 0)),   # resident weights
                pl.BlockSpec((n, 1), lambda i: (0, 0)),   # resident bias
            ],
            out_specs=pl.BlockSpec((n, tm), lambda i: (0, i)),
        ),
        compiler_params=_COMPILER_PARAMS,
    )(xq, w4, b4)
    return y[:, :m]


def _conv_stats_call(taps, wt, tm):
    # taps: (9*Ci, Mp) bf16 (already pixel-padded) ; wt: (Co, 9*Ci) bf16
    k, mp = taps.shape
    co = wt.shape[0]
    ntiles = mp // tm
    y, stats = pl.pallas_call(
        _conv_stats_kernel,
        out_shape=(
            jax.ShapeDtypeStruct((co, mp), jnp.bfloat16),          # pre-BN conv output
            jax.ShapeDtypeStruct((co, ntiles * 128), jnp.float32),  # per-tile partial stats
        ),
        grid_spec=pltpu.PrefetchScalarGridSpec(
            num_scalar_prefetch=0,
            grid=(ntiles,),
            in_specs=[
                pl.BlockSpec((k, tm), lambda i: (0, i)),
                pl.BlockSpec((co, k), lambda i: (0, 0)),  # resident weights
            ],
            out_specs=[
                pl.BlockSpec((co, tm), lambda i: (0, i)),
                pl.BlockSpec((co, 128), lambda i: (0, i)),
            ],
        ),
        compiler_params=_COMPILER_PARAMS,
    )(taps, wt)
    return y, stats


def _bn_relu_call(y, a, b, out_dtype, tm):
    co, mp = y.shape
    return pl.pallas_call(
        _bn_relu_kernel,
        out_shape=jax.ShapeDtypeStruct((co, mp), out_dtype),
        grid_spec=pltpu.PrefetchScalarGridSpec(
            num_scalar_prefetch=0,
            grid=(mp // tm,),
            in_specs=[
                pl.BlockSpec((co, tm), lambda i: (0, i)),
                pl.BlockSpec((co, 1), lambda i: (0, 0)),   # resident BN scale
                pl.BlockSpec((co, 1), lambda i: (0, 0)),   # resident BN shift
            ],
            out_specs=pl.BlockSpec((co, tm), lambda i: (0, i)),
        ),
        compiler_params=_COMPILER_PARAMS,
    )(y, a, b)


# ---------------- host-side glue (layout only, no compute) ----------------

def _im2col_cmajor(x_cbhw, tm_max):
    # x_cbhw: (C, B, H, W) channel-major.  Returns bf16 taps (9*C, Mp), tile, Mp.
    # TODO(synk): replace the host-side 9x im2col materialization with a spatially
    # blocked (halo) Pallas kernel that reads the padded input once.
    c, b, h, w = x_cbhw.shape
    m = b * h * w
    xp = jnp.pad(x_cbhw.astype(jnp.bfloat16), ((0, 0), (0, 0), (1, 1), (1, 1)))
    taps = jnp.stack(
        [xp[:, :, di:di + h, dj:dj + w] for di in range(3) for dj in range(3)],
        axis=0,
    ).reshape(9 * c, m)
    tm = _pick_tile(m, tm_max)
    mp = _round_up(m, tm)
    taps = jnp.pad(taps, ((0, 0), (0, mp - m)))
    return taps, tm, mp


def _finalize_bn(stats, n_pixels, gamma, beta, eps=1e-5):
    # stats: (Co, ntiles*128) per-tile partials -> folded per-channel scale/shift (f32).
    co = stats.shape[0]
    st = stats.reshape(co, -1, 128)
    s1 = jnp.sum(st[:, :, 0], axis=1)
    s2 = jnp.sum(st[:, :, 1], axis=1)
    mean = s1 / n_pixels
    var = jnp.maximum(s2 / n_pixels - mean * mean, 0.0)   # biased, BN training-mode stats
    a = gamma.reshape(-1) * jax.lax.rsqrt(var + eps)
    b = beta.reshape(-1) - mean * a
    return a.reshape(co, 1), b.reshape(co, 1)


def _conv3x3_bn_relu(x_cbhw, w_hwio, gamma, beta, *, tm_max, out_dtype):
    # x_cbhw: (Ci, B, H, W) channel-major -> (Co, B, H, W) channel-major.
    c, b, h, w = x_cbhw.shape
    co = w_hwio.shape[-1]
    m = b * h * w
    taps, tm, _ = _im2col_cmajor(x_cbhw, tm_max)
    wt = w_hwio.transpose(3, 0, 1, 2).reshape(co, 9 * c).astype(jnp.bfloat16)
    y, stats = _conv_stats_call(taps, wt, tm)
    scale, shift = _finalize_bn(stats, m, gamma, beta)
    o = _bn_relu_call(y, scale, shift, out_dtype, tm)
    return o[:, :m].reshape(co, b, h, w)


# ---------------- part_iwt3 forward (NCHW in / NCHW out, like PyTorch) ----------------

def part_iwt3_forward(params, x1_nchw, x2_nchw, *, tm=_DEFAULT_TM):
    w_mid, b_mid, w1, g1, be1, w2, g2, be2 = params
    B, C4, H, W = x1_nchw.shape
    Cin = C4 // 4
    Cm = w_mid.shape[1]

    # --- IWT (Haar combine folded into the 1x1 conv_mid weights) -> one matmul ---
    # rows of w4: 4 output planes (even/even, odd/even, even/odd, odd/odd), each Cm wide.
    S = jnp.array([[1., -1., -1., 1.],
                   [1., -1., 1., -1.],
                   [1., 1., -1., -1.],
                   [1., 1., 1., 1.]], jnp.float32)
    w4 = (0.5 * S[:, None, :, None] * w_mid.T[None, :, None, :]).reshape(4 * Cm, 4 * Cin)
    b4 = jnp.tile(b_mid.reshape(1, Cm), (4, 1)).reshape(4 * Cm, 1)

    x_km = (x1_nchw.transpose(1, 0, 2, 3)
            .reshape(4 * Cin, B * H * W)
            .astype(jnp.bfloat16))
    y4 = _iwt_conv1x1_call(x_km, w4.astype(jnp.bfloat16), b4, tm)   # (4*Cm, B*H*W)

    # pixel-shuffle interleave of the 4 sub-planes onto the 2H x 2W grid (channel-major)
    up = (y4.reshape(2, 2, Cm, B, H, W)      # [s, r, c, b, i, j]  (plane q = r + 2*s)
             .transpose(2, 3, 4, 1, 5, 0)    # -> [c, b, i, r, j, s]
             .reshape(Cm, B, 2 * H, 2 * W))

    # --- pad the upsampled branch to x2's spatial size, concat [x2, up] on channels ---
    _, c2, H2, W2 = x2_nchw.shape
    dY, dX = H2 - 2 * H, W2 - 2 * W
    up = jnp.pad(up, ((0, 0), (0, 0),
                      (dY // 2, dY - dY // 2),
                      (dX // 2, dX - dX // 2)))
    xc = jnp.concatenate([x2_nchw.transpose(1, 0, 2, 3), up], axis=0)  # (c2+Cm, B, H2, W2)

    # --- DoubleConv: (3x3 conv no-bias -> BN(batch stats) -> ReLU) x 2 ---
    h = _conv3x3_bn_relu(xc, w1, g1, be1, tm_max=tm, out_dtype=jnp.bfloat16)
    h = _conv3x3_bn_relu(h, w2, g2, be2, tm_max=tm, out_dtype=jnp.float32)
    return h.transpose(1, 0, 2, 3)   # channel-major -> NCHW


# ---------------- pure-JAX reference (mirrors the PyTorch code in NCHW, f32) ----------------

def reference_forward(params, x1, x2):
    w_mid, b_mid, w1, g1, be1, w2, g2, be2 = params
    B, C4, H, W = x1.shape
    C = C4 // 4
    q1 = x1[:, 0:C] / 2.0
    q2 = x1[:, C:2 * C] / 2.0
    q3 = x1[:, 2 * C:3 * C] / 2.0
    q4 = x1[:, 3 * C:4 * C] / 2.0
    h = jnp.zeros((B, C, 2 * H, 2 * W), jnp.float32)
    h = h.at[:, :, 0::2, 0::2].set(q1 - q2 - q3 + q4)
    h = h.at[:, :, 1::2, 0::2].set(q1 - q2 + q3 - q4)
    h = h.at[:, :, 0::2, 1::2].set(q1 + q2 - q3 - q4)
    h = h.at[:, :, 1::2, 1::2].set(q1 + q2 + q3 + q4)
    y = jnp.einsum('bchw,cd->bdhw', h, w_mid) + b_mid.reshape(1, -1, 1, 1)
    diffY = x2.shape[2] - y.shape[2]
    diffX = x2.shape[3] - y.shape[3]
    y = jnp.pad(y, ((0, 0), (0, 0),
                    (diffY // 2, diffY - diffY // 2),
                    (diffX // 2, diffX - diffX // 2)))
    xc = jnp.concatenate([x2, y], axis=1)

    def conv_bn_relu_ref(x, w_hwio, gamma, beta):
        w_oihw = jnp.transpose(w_hwio, (3, 2, 0, 1))
        o = jax.lax.conv_general_dilated(
            x, w_oihw, window_strides=(1, 1), padding=((1, 1), (1, 1)),
            dimension_numbers=('NCHW', 'OIHW', 'NCHW'))
        mean = o.mean(axis=(0, 2, 3), keepdims=True)
        var = jnp.mean(jnp.square(o - mean), axis=(0, 2, 3), keepdims=True)
        o = (o - mean) * jax.lax.rsqrt(var + 1e-5)
        o = o * gamma.reshape(1, -1, 1, 1) + beta.reshape(1, -1, 1, 1)
        return jnp.maximum(o, 0.0)

    xc = conv_bn_relu_ref(xc, w1, g1, be1)
    return conv_bn_relu_ref(xc, w2, g2, be2)


if __name__ == "__main__":
    key = jax.random.PRNGKey(0)
    k1, k2, k3, k4, k5, k6 = jax.random.split(key, 6)

    # part_iwt3(mid_in=4, mid_out=8, in_channels=16, out_channels=16)
    B, mid_in, H, W = 2, 4, 8, 8
    mid_out = 8
    c2 = 8
    in_channels = c2 + mid_out      # channels after concat
    out_channels = 16

    x1 = jax.random.normal(k1, (B, 4 * mid_in, H, W), jnp.float32)          # (2, 16, 8, 8)
    x2 = jax.random.normal(k2, (B, c2, 2 * H, 2 * W), jnp.float32)          # (2, 8, 16, 16)

    # deterministic synthetic parameters (shapes follow the PyTorch module's __init__)
    w_mid = jax.random.normal(k3, (mid_in, mid_out), jnp.float32) / jnp.sqrt(mid_in)
    b_mid = 0.05 * jax.random.normal(k4, (1, mid_out), jnp.float32)
    w1 = jax.random.normal(k5, (3, 3, in_channels, out_channels), jnp.float32) / jnp.sqrt(9.0 * in_channels)
    w2 = jax.random.normal(k6, (3, 3, out_channels, out_channels), jnp.float32) / jnp.sqrt(9.0 * out_channels)
    g1 = jnp.ones((1, out_channels), jnp.float32)    # BatchNorm default init
    be1 = jnp.zeros((1, out_channels), jnp.float32)
    g2 = jnp.ones((1, out_channels), jnp.float32)
    be2 = jnp.zeros((1, out_channels), jnp.float32)
    params = (w_mid, b_mid, w1, g1, be1, w2, g2, be2)

    out = jax.jit(part_iwt3_forward)(params, x1, x2)
    out = jax.block_until_ready(out)
    assert out.shape == (B, out_channels, 2 * H, 2 * W), out.shape

    ref = reference_forward(params, x1, x2)
    # bf16 matmul operands (f32 accumulation) -> small relative error vs the f32 reference.
    assert jnp.allclose(out, ref, atol=5e-2, rtol=5e-2), \
        float(jnp.max(jnp.abs(out - ref)))

    print("KERNEL_OK")
</pallas_src>

<mosaic_0001>
module attributes {stable_mosaic.version = 11 : i64} {
  func.func @_gemm_bias_kernel(%arg0: i32, %arg1: memref<16x128xbf16, #tpu.memory_space<vmem>>, %arg2: memref<32x16xbf16, #tpu.memory_space<vmem>>, %arg3: memref<32x1xf32, #tpu.memory_space<vmem>>, %arg4: memref<32x128xf32, #tpu.memory_space<vmem>>) attributes {dimension_semantics = [#tpu.dimension_semantics<parallel>], iteration_bounds = array<i64: 1>, scalar_prefetch = 0 : i64, scratch_operands = 0 : i64, tpu.core_type = #tpu.core_type<tc>, window_params = [{transform_indices = @transform_0, window_bounds = array<i64: 16, 128>}, {pipeline_mode = #tpu.pipeline_mode<synchronous>, transform_indices = @transform_1, window_bounds = array<i64: 32, 16>}, {pipeline_mode = #tpu.pipeline_mode<synchronous>, transform_indices = @transform_2, window_bounds = array<i64: 32, 1>}, {transform_indices = @transform_3, window_bounds = array<i64: 32, 128>}]} {
    %c0 = arith.constant 0 : index
    %c0_0 = arith.constant 0 : index
    %0 = vector.load %arg2[%c0, %c0_0] : memref<32x16xbf16, #tpu.memory_space<vmem>>, vector<32x16xbf16>
    %c0_1 = arith.constant 0 : index
    %c0_2 = arith.constant 0 : index
    %1 = vector.load %arg1[%c0_1, %c0_2] : memref<16x128xbf16, #tpu.memory_space<vmem>>, vector<16x128xbf16>
    %cst = arith.constant dense<0.000000e+00> : vector<32x128xf32>
    %2 = tpu.matmul %0, %1, %cst {dimension_numbers = #tpu.dot_dimension_numbers<[1], [0], [0], [1], [0, 0, 1, 1], [], []>} : vector<32x16xbf16>, vector<16x128xbf16>, vector<32x128xf32> -> vector<32x128xf32>
    %c0_3 = arith.constant 0 : index
    %c0_4 = arith.constant 0 : index
    %3 = vector.load %arg3[%c0_3, %c0_4] : memref<32x1xf32, #tpu.memory_space<vmem>>, vector<32x1xf32>
    %4 = vector.broadcast %3 : vector<32x1xf32> to vector<32x128xf32>
    %5 = arith.addf %2, %4 : vector<32x128xf32>
    %c0_5 = arith.constant 0 : index
    %c0_6 = arith.constant 0 : index
    %6 = vector.load %arg4[%c0_5, %c0_6] : memref<32x128xf32, #tpu.memory_space<vmem>>, vector<32x128xf32>
    tpu.vector_store %arg4[%c0_5, %c0_6], %5 {strides = array<i32>} : memref<32x128xf32, #tpu.memory_space<vmem>>, vector<32x128xf32>,
    return
  }
  func.func @transform_0(%arg0: i32) -> (i32, i32) {
    %c0_i32 = arith.constant 0 : i32
    %c0_i32_0 = arith.constant 0 : i32
    return %c0_i32, %arg0 : i32, i32
  }
  func.func @transform_1(%arg0: i32) -> (i32, i32) {
    %c0_i32 = arith.constant 0 : i32
    %c0_i32_0 = arith.constant 0 : i32
    %c0_i32_1 = arith.constant 0 : i32
    return %c0_i32, %c0_i32_0 : i32, i32
  }
  func.func @transform_2(%arg0: i32) -> (i32, i32) {
    %c0_i32 = arith.constant 0 : i32
    %c0_i32_0 = arith.constant 0 : i32
    %c0_i32_1 = arith.constant 0 : i32
    return %c0_i32, %c0_i32_0 : i32, i32
  }
  func.func @transform_3(%arg0: i32) -> (i32, i32) {
    %c0_i32 = arith.constant 0 : i32
    %c0_i32_0 = arith.constant 0 : i32
    return %c0_i32, %arg0 : i32, i32
  }
}

module attributes {stable_mosaic.version = 11 : i64} {
  func.func @_conv_stats_kernel(%arg0: i32, %arg1: memref<144x256xbf16, #tpu.memory_space<vmem>>, %arg2: memref<16x144xbf16, #tpu.memory_space<vmem>>, %arg3: memref<16x256xbf16, #tpu.memory_space<vmem>>, %arg4: memref<16x128xf32, #tpu.memory_space<vmem>>) attributes {dimension_semantics = [#tpu.dimension_semantics<parallel>], iteration_bounds = array<i64: 2>, scalar_prefetch = 0 : i64, scratch_operands = 0 : i64, tpu.core_type = #tpu.core_type<tc>, window_params = [{transform_indices = @transform_0, window_bounds = array<i64: 144, 256>}, {pipeline_mode = #tpu.pipeline_mode<synchronous>, transform_indices = @transform_1, window_bounds = array<i64: 16, 144>}, {transform_indices = @transform_2, window_bounds = array<i64: 16, 256>}, {transform_indices = @transform_3, window_bounds = array<i64: 16, 128>}]} {
    %c0 = arith.constant 0 : index
    %c0_0 = arith.constant 0 : index
    %0 = vector.load %arg2[%c0, %c0_0] : memref<16x144xbf16, #tpu.memory_space<vmem>>, vector<16x144xbf16>
    %c0_1 = arith.constant 0 : index
    %c0_2 = arith.constant 0 : index
    %1 = vector.load %arg1[%c0_1, %c0_2] : memref<144x256xbf16, #tpu.memory_space<vmem>>, vector<144x256xbf16>
    %cst = arith.constant dense<0.000000e+00> : vector<16x256xf32>
    %2 = tpu.matmul %0, %1, %cst {dimension_numbers = #tpu.dot_dimension_numbers<[1], [0], [0], [1], [0, 0, 1, 1], [], []>} : vector<16x144xbf16>, vector<144x256xbf16>, vector<16x256xf32> -> vector<16x256xf32>
    %3 = arith.truncf %2 : vector<16x256xf32> to vector<16x256xbf16>
    %c0_3 = arith.constant 0 : index
    %c0_4 = arith.constant 0 : index
    %4 = vector.load %arg3[%c0_3, %c0_4] : memref<16x256xbf16, #tpu.memory_space<vmem>>, vector<16x256xbf16>
    tpu.vector_store %arg3[%c0_3, %c0_4], %3 {strides = array<i32>} : memref<16x256xbf16, #tpu.memory_space<vmem>>, vector<16x256xbf16>,
    %cst_5 = arith.constant 0.000000e+00 : f32
    %5 = vector.broadcast %cst_5 : f32 to vector<16x128xf32>
    %c0_6 = arith.constant 0 : index
    %c0_7 = arith.constant 0 : index
    %6 = vector.load %arg4[%c0_6, %c0_7] : memref<16x128xf32, #tpu.memory_space<vmem>>, vector<16x128xf32>
    tpu.vector_store %arg4[%c0_6, %c0_7], %5 {strides = array<i32>} : memref<16x128xf32, #tpu.memory_space<vmem>>, vector<16x128xf32>,
    %cst_8 = arith.constant dense<0.000000e+00> : vector<16xf32>
    %7 = vector.multi_reduction <add>, %2, %cst_8 [1] : vector<16x256xf32> to vector<16xf32>
    %8 = vector.shape_cast %7 : vector<16xf32> to vector<16x1xf32>
    %c0_9 = arith.constant 0 : index
    %c0_10 = arith.constant 0 : index
    %9 = vector.load %arg4[%c0_9, %c0_10] : memref<16x128xf32, #tpu.memory_space<vmem>>, vector<16x1xf32>
    tpu.vector_store %arg4[%c0_9, %c0_10], %8 {strides = array<i32>} : memref<16x128xf32, #tpu.memory_space<vmem>>, vector<16x1xf32>,
    %10 = arith.mulf %2, %2 : vector<16x256xf32>
    %cst_11 = arith.constant dense<0.000000e+00> : vector<16xf32>
    %11 = vector.multi_reduction <add>, %10, %cst_11 [1] : vector<16x256xf32> to vector<16xf32>
    %12 = vector.shape_cast %11 : vector<16xf32> to vector<16x1xf32>
    %c0_12 = arith.constant 0 : index
    %c1 = arith.constant 1 : index
    %13 = vector.load %arg4[%c0_12, %c1] : memref<16x128xf32, #tpu.memory_space<vmem>>, vector<16x1xf32>
    tpu.vector_store %arg4[%c0_12, %c1], %12 {strides = array<i32>} : memref<16x128xf32, #tpu.memory_space<vmem>>, vector<16x1xf32>,
    return
  }
  func.func @transform_0(%arg0: i32) -> (i32, i32) {
    %c0_i32 = arith.constant 0 : i32
    %c0_i32_0 = arith.constant 0 : i32
    return %c0_i32, %arg0 : i32, i32
  }
  func.func @transform_1(%arg0: i32) -> (i32, i32) {
    %c0_i32 = arith.constant 0 : i32
    %c0_i32_0 = arith.constant 0 : i32
    %c0_i32_1 = arith.constant 0 : i32
    return %c0_i32, %c0_i32_0 : i32, i32
  }
  func.func @transform_2(%arg0: i32) -> (i32, i32) {
    %c0_i32 = arith.constant 0 : i32
    %c0_i32_0 = arith.constant 0 : i32
    return %c0_i32, %arg0 : i32, i32
  }
  func.func @transform_3(%arg0: i32) -> (i32, i32) {
    %c0_i32 = arith.constant 0 : i32
    %c0_i32_0 = arith.constant 0 : i32
    return %c0_i32, %arg0 : i32, i32
  }
}

module attributes {stable_mosaic.version = 11 : i64} {
  func.func @_bn_relu_kernel(%arg0: i32, %arg1: memref<16x256xbf16, #tpu.memory_space<vmem>>, %arg2: memref<16x1xf32, #tpu.memory_space<vmem>>, %arg3: memref<16x1xf32, #tpu.memory_space<vmem>>, %arg4: memref<16x256xbf16, #tpu.memory_space<vmem>>) attributes {dimension_semantics = [#tpu.dimension_semantics<parallel>], iteration_bounds = array<i64: 2>, scalar_prefetch = 0 : i64, scratch_operands = 0 : i64, tpu.core_type = #tpu.core_type<tc>, window_params = [{transform_indices = @transform_0, window_bounds = array<i64: 16, 256>}, {pipeline_mode = #tpu.pipeline_mode<synchronous>, transform_indices = @transform_1, window_bounds = array<i64: 16, 1>}, {pipeline_mode = #tpu.pipeline_mode<synchronous>, transform_indices = @transform_2, window_bounds = array<i64: 16, 1>}, {transform_indices = @transform_3, window_bounds = array<i64: 16, 256>}]} {
    %c0 = arith.constant 0 : index
    %c0_0 = arith.constant 0 : index
    %0 = vector.load %arg1[%c0, %c0_0] : memref<16x256xbf16, #tpu.memory_space<vmem>>, vector<16x256xbf16>
    %1 = arith.extf %0 : vector<16x256xbf16> to vector<16x256xf32>
    %c0_1 = arith.constant 0 : index
    %c0_2 = arith.constant 0 : index
    %2 = vector.load %arg2[%c0_1, %c0_2] : memref<16x1xf32, #tpu.memory_space<vmem>>, vector<16x1xf32>
    %3 = vector.broadcast %2 : vector<16x1xf32> to vector<16x256xf32>
    %4 = arith.mulf %1, %3 : vector<16x256xf32>
    %c0_3 = arith.constant 0 : index
    %c0_4 = arith.constant 0 : index
    %5 = vector.load %arg3[%c0_3, %c0_4] : memref<16x1xf32, #tpu.memory_space<vmem>>, vector<16x1xf32>
    %6 = vector.broadcast %5 : vector<16x1xf32> to vector<16x256xf32>
    %7 = arith.addf %4, %6 : vector<16x256xf32>
    %cst = arith.constant 0.000000e+00 : f32
    %8 = vector.broadcast %cst : f32 to vector<16x256xf32>
    %9 = arith.maximumf %7, %8 : vector<16x256xf32>
    %10 = arith.truncf %9 : vector<16x256xf32> to vector<16x256xbf16>
    %c0_5 = arith.constant 0 : index
    %c0_6 = arith.constant 0 : index
    %11 = vector.load %arg4[%c0_5, %c0_6] : memref<16x256xbf16, #tpu.memory_space<vmem>>, vector<16x256xbf16>
    tpu.vector_store %arg4[%c0_5, %c0_6], %10 {strides = array<i32>} : memref<16x256xbf16, #tpu.memory_space<vmem>>, vector<16x256xbf16>,
    return
  }
  func.func @transform_0(%arg0: i32) -> (i32, i32) {
    %c0_i32 = arith.constant 0 : i32
    %c0_i32_0 = arith.constant 0 : i32
    return %c0_i32, %arg0 : i32, i32
  }
  func.func @transform_1(%arg0: i32) -> (i32, i32) {
    %c0_i32 = arith.constant 0 : i32
    %c0_i32_0 = arith.constant 0 : i32
    %c0_i32_1 = arith.constant 0 : i32
    return %c0_i32, %c0_i32_0 : i32, i32
  }
  func.func @transform_2(%arg0: i32) -> (i32, i32) {
    %c0_i32 = arith.constant 0 : i32
    %c0_i32_0 = arith.constant 0 : i32
    %c0_i32_1 = arith.constant 0 : i32
    return %c0_i32, %c0_i32_0 : i32, i32
  }
  func.func @transform_3(%arg0: i32) -> (i32, i32) {
    %c0_i32 = arith.constant 0 : i32
    %c0_i32_0 = arith.constant 0 : i32
    return %c0_i32, %arg0 : i32, i32
  }
}

module attributes {stable_mosaic.version = 11 : i64} {
  func.func @_bn_relu_kernel(%arg0: i32, %arg1: memref<16x256xbf16, #tpu.memory_space<vmem>>, %arg2: memref<16x1xf32, #tpu.memory_space<vmem>>, %arg3: memref<16x1xf32, #tpu.memory_space<vmem>>, %arg4: memref<16x256xf32, #tpu.memory_space<vmem>>) attributes {dimension_semantics = [#tpu.dimension_semantics<parallel>], iteration_bounds = array<i64: 2>, scalar_prefetch = 0 : i64, scratch_operands = 0 : i64, tpu.core_type = #tpu.core_type<tc>, window_params = [{transform_indices = @transform_0, window_bounds = array<i64: 16, 256>}, {pipeline_mode = #tpu.pipeline_mode<synchronous>, transform_indices = @transform_1, window_bounds = array<i64: 16, 1>}, {pipeline_mode = #tpu.pipeline_mode<synchronous>, transform_indices = @transform_2, window_bounds = array<i64: 16, 1>}, {transform_indices = @transform_3, window_bounds = array<i64: 16, 256>}]} {
    %c0 = arith.constant 0 : index
    %c0_0 = arith.constant 0 : index
    %0 = vector.load %arg1[%c0, %c0_0] : memref<16x256xbf16, #tpu.memory_space<vmem>>, vector<16x256xbf16>
    %1 = arith.extf %0 : vector<16x256xbf16> to vector<16x256xf32>
    %c0_1 = arith.constant 0 : index
    %c0_2 = arith.constant 0 : index
    %2 = vector.load %arg2[%c0_1, %c0_2] : memref<16x1xf32, #tpu.memory_space<vmem>>, vector<16x1xf32>
    %3 = vector.broadcast %2 : vector<16x1xf32> to vector<16x256xf32>
    %4 = arith.mulf %1, %3 : vector<16x256xf32>
    %c0_3 = arith.constant 0 : index
    %c0_4 = arith.constant 0 : index
    %5 = vector.load %arg3[%c0_3, %c0_4] : memref<16x1xf32, #tpu.memory_space<vmem>>, vector<16x1xf32>
    %6 = vector.broadcast %5 : vector<16x1xf32> to vector<16x256xf32>
    %7 = arith.addf %4, %6 : vector<16x256xf32>
    %cst = arith.constant 0.000000e+00 : f32
    %8 = vector.broadcast %cst : f32 to vector<16x256xf32>
    %9 = arith.maximumf %7, %8 : vector<16x256xf32>
    %c0_5 = arith.constant 0 : index
    %c0_6 = arith.constant 0 : index
    %10 = vector.load %arg4[%c0_5, %c0_6] : memref<16x256xf32, #tpu.memory_space<vmem>>, vector<16x256xf32>
    tpu.vector_store %arg4[%c0_5, %c0_6], %9 {strides = array<i32>} : memref<16x256xf32, #tpu.memory_space<vmem>>, vector<16x256xf32>,
    return
  }
  func.func @transform_0(%arg0: i32) -> (i32, i32) {
    %c0_i32 = arith.constant 0 : i32
    %c0_i32_0 = arith.constant 0 : i32
    return %c0_i32, %arg0 : i32, i32
  }
  func.func @transform_1(%arg0: i32) -> (i32, i32) {
    %c0_i32 = arith.constant 0 : i32
    %c0_i32_0 = arith.constant 0 : i32
    %c0_i32_1 = arith.constant 0 : i32
    return %c0_i32, %c0_i32_0 : i32, i32
  }
  func.func @transform_2(%arg0: i32) -> (i32, i32) {
    %c0_i32 = arith.constant 0 : i32
    %c0_i32_0 = arith.constant 0 : i32
    %c0_i32_1 = arith.constant 0 : i32
    return %c0_i32, %c0_i32_0 : i32, i32
  }
  func.func @transform_3(%arg0: i32) -> (i32, i32) {
    %c0_i32 = arith.constant 0 : i32
    %c0_i32_0 = arith.constant 0 : i32
    return %c0_i32, %arg0 : i32, i32
  }
}

</mosaic_0001>

<llo_original>
// kernel: tile.8
$region0: #{tile.8}
  #allocation2 [shape = 's32[1]{0}', space=sflag, size = 0x4, scoped, tag = 'scoped memory for tile.8']
  %s0 = inlined_call_operand.hbm [shape: f32[8], index: 0, kind: input, shape index: {}]
  %s1 = inlined_call_operand.vmem [shape: f32[4,1,1,8], index: 1, kind: output, shape index: {}]
  $region1: #{tile.8} parent=0
    #allocation0 [shape = 'u8[512]{0}', space=vmem, size = 0x400, scoped, tag = 'operand span for operand 0']
    #allocation1 [shape = 's32[1]{0}', space=sflag, size = 0x4, scoped, tag = 'scoped memory for tile.8']
    %2 = vsyncpa [#allocation1], 0
    // Predicated region
    $region2: #{tile.8} parent=1 // pred_check
      _
    $region3: #{tile.8} parent=1 // pred_check_branch
      %4 = sbr.rel (0) target = $region5
    $region4: #{tile.8} parent=1 // pred_region
      %s6 = ssub.s32 16, 16
      %7 = vsyncadd [#allocation1], %s6
      %s9 = sshll.u32 [#allocation0], 4
      %s10 = int_to_ptr.vmem [resolvable:$true] %s9
      %12 = dma.hbm_to_vmem [thread:$0]  %s0, 16, %s10, [#allocation1]
    $region5: #{tile.8} parent=1 // pred_fallthru
      _
    // Predicated region
    $region6: #{tile.8} parent=1 // pred_check
      _
    $region7: #{tile.8} parent=1 // pred_check_branch
      %14 = sbr.rel (0) target = $region9
    $region8: #{tile.8} parent=1 // pred_region
      %15 = dma.done [#allocation1], 16
    $region9: #{tile.8} parent=1 // pred_fallthru
      _
    %v16 = vld [vmem:[#allocation0] ss:$0 sm:$0xff]
    %17 = vst [vmem:[%s1] sm:$0xf] %v16
    %18 = vsyncpa [#allocation1], 1

// kernel: tile.0
$region0: #{tile.0}
  %s0 = inlined_call_operand.vmem [shape: f32[4,1,1,8], index: 0, kind: input, shape index: {}]
  %s1 = inlined_call_operand.vmem [shape: f32[32,1], index: 1, kind: output, shape index: {}]
  $region1: #{tile.0} parent=0
    #allocation0 [shape = 'u8[4096]{0}', space=vmem, size = 0x1000, scoped, tag = 'scoped mem for input reshape']
    %s3 = sshll.u32 1, 4
    %s4 = ssub.s32 %s3, 1
    %v5 = vld [vmem:[%s0] sm:%s4]
    %6 = vst [vmem:[#allocation0] sm:%s4] %v5
    %v7 = vld [vmem:[#allocation0] sm:$0xf]
    %vm8 = vcmask 7168
    %9 = vst.msk [vmem:[%s1] ss:$8 sm:$0xf] %vm8, %v7
    %v10 = vld [vmem:[#allocation0] sm:$0xf]
    %11 = vrot.lane.b32.xlu0 %v10, 127
    %v12 = vpop.permute.xlu0 %11
    %vm13 = vcmask 7168
    %s14 = scalar_lea.vmem %s1, 1
    %15 = vst.msk [vmem:[%s14] ss:$8 sm:$0xf] %vm13, %v12
    %v16 = vld [vmem:[#allocation0] sm:$0xf]
    %17 = vrot.lane.b32.xlu0 %v16, 126
    %v18 = vpop.permute.xlu0 %17
    %vm19 = vcmask 7168
    %s20 = scalar_lea.vmem %s1, 2
    %21 = vst.msk [vmem:[%s20] ss:$8 sm:$0xf] %vm19, %v18
    %v22 = vld [vmem:[#allocation0] sm:$0xf]
    %23 = vrot.lane.b32.xlu0 %v22, 125
    %v24 = vpop.permute.xlu0 %23
    %vm25 = vcmask 7168
    %s26 = scalar_lea.vmem %s1, 3
    %27 = vst.msk [vmem:[%s26] ss:$8 sm:$0xf] %vm25, %v24
    %v28 = vld [vmem:[#allocation0] sm:$0xf]
    %29 = vrot.lane.b32.xlu0 %v28, 124
    %v30 = vpop.permute.xlu0 %29
    %vm31 = vcmask 7168
    %s32 = scalar_lea.vmem %s1, 4
    %33 = vst.msk [vmem:[%s32] ss:$8 sm:$0xf] %vm31, %v30
    %v34 = vld [vmem:[#allocation0] sm:$0xf]
    %35 = vrot.lane.b32.xlu0 %v34, 123
    %v36 = vpop.permute.xlu0 %35
    %vm37 = vcmask 7168
    %s38 = scalar_lea.vmem %s1, 5
    %39 = vst.msk [vmem:[%s38] ss:$8 sm:$0xf] %vm37, %v36
    %v40 = vld [vmem:[#allocation0] sm:$0xf]
    %41 = vrot.lane.b32.xlu0 %v40, 122
    %v42 = vpop.permute.xlu0 %41
    %vm43 = vcmask 7168
    %s44 = scalar_lea.vmem %s1, 6
    %45 = vst.msk [vmem:[%s44] ss:$8 sm:$0xf] %vm43, %v42
    %v46 = vld [vmem:[#allocation0] sm:$0xf]
    %47 = vrot.lane.b32.xlu0 %v46, 121
    %v48 = vpop.permute.xlu0 %47
    %vm49 = vcmask 7168
    %s50 = scalar_lea.vmem %s1, 7
    %51 = vst.msk [vmem:[%s50] ss:$8 sm:$0xf] %vm49, %v48

// kernel: part_iwt3_forward.5
$region0: #{part_iwt3_forward.5}
  #allocation0 [shape = 'u32[]', space=smem, size = 0x4, offset = 0x4, fixed_abs, tag = 'smem constant byte address 0x4 - core index']
  #allocation1 [shape = 'u32[144,128]{1,0:T(1,128)}', space=vmem, size = 0x12000, scoped, tag = 'internal scratch']
  %s0 = inlined_call_operand.vmem [shape: bf16[16,128], index: 0, kind: input, shape index: {}]
  %s1 = inlined_call_operand.vmem [shape: bf16[32,16], index: 1, kind: input, shape index: {}]
  %s2 = inlined_call_operand.vmem [shape: f32[32,1], index: 2, kind: input, shape index: {}]
  %s3 = inlined_call_operand.vmem [shape: f32[32,128], index: 3, kind: output, shape index: {}]
  %s4 = sld [smem:[#allocation0]]
  $region22: #{part_iwt3_forward.5} parent=0
    _
  %s6 = ssub.s32 1, %s4
  %s7 = scalar_select 0, %s6, %s4
  // Predicated region
  $region2: #{part_iwt3_forward.5} parent=0 // pred_check
    _
  $region3: #{part_iwt3_forward.5} parent=0 // pred_check_branch
    %9 = sbr.rel (0) target = $region5
  $region4: #{part_iwt3_forward.5} parent=0 // pred_region
    _
  $region5: #{part_iwt3_forward.5} parent=0 // pred_fallthru
    _
  // Predicated region
  $region6: #{part_iwt3_forward.5} parent=0 // pred_check
    _
  $region7: #{part_iwt3_forward.5} parent=0 // pred_check_branch
    %11 = sbr.rel (0) target = $region9
  $region8: #{part_iwt3_forward.5} parent=0 // pred_region
    _
  $region9: #{part_iwt3_forward.5} parent=0 // pred_fallthru
    _
  // Predicated region
  $region10: #{part_iwt3_forward.5} parent=0 // pred_check
    _
  $region11: #{part_iwt3_forward.5} parent=0 // pred_check_branch
    %13 = sbr.rel (0) target = $region13
  $region12: #{part_iwt3_forward.5} parent=0 // pred_region
    _
  $region13: #{part_iwt3_forward.5} parent=0 // pred_fallthru
    _
  %v15 = vld [vmem:[%s1] sm:$0xf]
  %v16 = vld [vmem:[%s1 + $0x4] sm:$0xf]
  %v17 = vld [vmem:[%s1 + $0x8] sm:$0xf]
  %v18 = vld [vmem:[%s1 + $0xc] sm:$0xf]
  %v19 = vld [vmem:[%s0] sm:$0xf]
  %v20 = vld [vmem:[%s0 + $0x4] sm:$0xf]
  %v21 = vld [vmem:[%s2] sm:$0xff]
  %v22 = vld [vmem:[%s2 + $0x8] sm:$0xff]
  %v23 = vld [vmem:[%s2 + $0x10] sm:$0xff]
  %v24 = vld [vmem:[%s2 + $0x18] sm:$0xff]
  %26 = vset.pattern.permute.xlu0 0
  %27 = vperm.xlu0 %26, %v21
  %v28 = vpop.permute.xlu0 %27
  %31 = vset.pattern.permute.xlu0 0
  %32 = vperm.xlu0 %31, %v22
  %v33 = vpop.permute.xlu0 %32
  %36 = vset.pattern.permute.xlu0 0
  %37 = vperm.xlu0 %36, %v23
  %v38 = vpop.permute.xlu0 %37
  %41 = vset.pattern.permute.xlu0 0
  %42 = vperm.xlu0 %41, %v24
  %v43 = vpop.permute.xlu0 %42
  %v49 = vunpack.c.l.b16 %v15
  %v50 = vunpack.c.l.b16 %v16
  %v51 = vunpack.c.l.b16 %v17
  %v52 = vunpack.c.l.b16 %v18
  %v53 = vpack.c.b16 %v50, %v49
  %v54 = vpack.c.b16 %v52, %v51
  %v57 = vunpack.c.l.b16 %v19
  %v58 = vunpack.c.l.b16 %v20
  %v59 = vpack.c.b16 %v58, %v57
  %vm61 = vcmask 130048
  %v63 = vsel %vm61, %v53, 0
  %v66 = vsel %vm61, %v54, 0
  %68 = vmatprep.subr.bf16.mxu0 0
  %69 = vmatpush1.bf16.msra.mxu0 0
  %70 = vmatprep.subr.bf16.mxu0 0
  %71 = vmatpush1.bf16.msra.mxu0 0
  %72 = vmatprep.subr.bf16.mxu0 0
  %73 = vmatpush1.bf16.msra.mxu0 0
  %74 = vmatprep.subr.bf16.mxu0 0
  %75 = vmatpush1.bf16.msra.mxu0 0
  %76 = vmatprep.subr.bf16.mxu0 0
  %77 = vmatpush1.bf16.msra.mxu0 0
  %78 = vmatprep.subr.bf16.mxu0 0
  %79 = vmatpush1.bf16.msra.mxu0 0
  %80 = vmatprep.subr.bf16.mxu0 0
  %81 = vmatpush1.bf16.msra.mxu0 0
  %82 = vmatprep.subr.bf16.mxu0 0
  %83 = vmatpush1.bf16.msra.mxu0 %v59
  %84 = vmatprep.subr.bf16.mxu0 0
  %85 = vmatpush2.bf16.msra.mxu0 0
  %86 = vmatprep.subr.bf16.mxu0 0
  %87 = vmatpush2.bf16.msra.mxu0 0
  %88 = vmatprep.subr.bf16.mxu0 0
  %89 = vmatpush2.bf16.msra.mxu0 0
  %90 = vmatprep.subr.bf16.mxu0 0
  %91 = vmatpush2.bf16.msra.mxu0 0
  %92 = vmatprep.subr.bf16.mxu0 0
  %93 = vmatpush2.bf16.msra.mxu0 0
  %94 = vmatprep.subr.bf16.mxu0 0
  %95 = vmatpush2.bf16.msra.mxu0 0
  %96 = vmatprep.subr.bf16.mxu0 0
  %97 = vmatpush2.bf16.msra.mxu0 0
  %98 = vmatprep.subr.bf16.mxu0 0
  %99 = vmatpush2.bf16.msra.mxu0 0
  %100 = vmatprep.mubr.bf16.mxu0 0
  %101 = vmatmul.mubr.bf16.gmra.mxu0 %v63
  %v102 = vpop.f32.mrf.mxu0
  %v103 = vadd.f32 %v28, %v102
  %v104 = vpop.f32.mrf.mxu0
  %v105 = vpop.f32.mrf.mxu0
  %v106 = vadd.f32 %v33, %v105
  %v107 = vpop.f32.mrf.mxu0
  %108 = vmatprep.mubr.bf16.mxu0 0
  %109 = vmatmul.mubr.bf16.gmra.mxu0 %v66
  %v110 = vpop.f32.mrf.mxu0
  %v111 = vadd.f32 %v38, %v110
  %v112 = vpop.f32.mrf.mxu0
  %v113 = vpop.f32.mrf.mxu0
  %v114 = vadd.f32 %v43, %v113
  %v115 = vpop.f32.mrf.mxu0
  %116 = vdwg.mxu0
  %117 = vst [vmem:[%s3] sm:$0xff] %v103
  %118 = vst [vmem:[%s3 + $0x8] sm:$0xff] %v106
  %119 = vst [vmem:[%s3 + $0x10] sm:$0xff] %v111
  %120 = vst [vmem:[%s3 + $0x18] sm:$0xff] %v114
  // Predicated region
  $region14: #{part_iwt3_forward.5} parent=0 // pred_check
    _
  $region15: #{part_iwt3_forward.5} parent=0 // pred_check_branch
    %122 = sbr.rel (0) target = $region17
  $region16: #{part_iwt3_forward.5} parent=0 // pred_region
    _
  $region17: #{part_iwt3_forward.5} parent=0 // pred_fallthru
    _
  // Predicated region
  $region18: #{part_iwt3_forward.5} parent=0 // pred_check
    _
  $region19: #{part_iwt3_forward.5} parent=0 // pred_check_branch
    %124 = sbr.rel (0) target = $region21
  $region20: #{part_iwt3_forward.5} parent=0 // pred_region
    _
  $region21: #{part_iwt3_forward.5} parent=0 // pred_fallthru
    _

// kernel: part_iwt3_forward.6
$region0: #{part_iwt3_forward.6}
  #allocation0 [shape = 'u32[]', space=smem, size = 0x4, offset = 0x4, fixed_abs, tag = 'smem constant byte address 0x4 - core index']
  #allocation1 [shape = 'u32[144,128]{1,0:T(1,128)}', space=vmem, size = 0x12000, scoped, tag = 'internal scratch']
  %s0 = inlined_call_operand.vmem [shape: bf16[144,512], index: 0, kind: input, shape index: {}]
  %s1 = inlined_call_operand.vmem [shape: bf16[16,144], index: 1, kind: input, shape index: {}]
  %s2 = inlined_call_operand.vmem [shape: bf16[16,512], index: 2, kind: output, shape index: {0}]
  %s3 = inlined_call_operand.vmem [shape: f32[16,256], index: 3, kind: output, shape index: {1}]
  %4 = xla_tuple %s2, %s3
  %s5 = sld [smem:[#allocation0]]
  $region155: #{part_iwt3_forward.6} parent=0
    _
  %s7 = ssub.s32 1, %s5
  %s8 = scalar_select 0, %s7, %s5
  $region1: #{part_iwt3_forward.6} parent=0
    #allocation2 [shape = 'u8[147456]{0}', space=vmem, size = 0x24000, scoped, tag = 'input window, operand 0']
    #allocation3 [shape = 'u8[16384]{0}', space=vmem, size = 0x4000, scoped, tag = 'output window, operand 0']
    #allocation4 [shape = 'u8[16384]{0}', space=vmem, size = 0x4000, scoped, tag = 'output window, operand 1']
    loop: start=0, step=1, limit=4
    $region2: #{part_iwt3_forward.6} parent=1 // loop_pre_header
      _
    $region3: #{part_iwt3_forward.6} parent=1 // loop_header
      %s10 = sphi 0, %s14
      %p11 = scmp.ge.s32.totalorder %s10, 4
      %s20 = sphi 0, %s22
      %s23 = sphi 0, %s20
      %s24 = sphi 0, %s23
      %s40 = sphi 0, %s24
      %s44 = sphi 0, %s44
      %s46 = sphi 0, %s44
      %s47 = sphi 0, %s46
      %s61 = sphi 0, %s47
      %s67 = sphi 0, %s69
      %s70 = sphi 0, %s67
      %s71 = sphi 0, %s70
      %s87 = sphi 0, %s71
      %s93 = sphi 0, %s95
      %s96 = sphi 0, %s93
      %s97 = sphi 0, %s96
      %s113 = sphi 0, %s97
    $region4: #{part_iwt3_forward.6} parent=1 // loop_header_branch
      %13 = sbr.rel (%p11) target = $region8
    $region5: #{part_iwt3_forward.6} parent=1 // loop_body
      %s15 = ssub.s32 %s10, 1
      %s16 = ssub.s32 %s10, 2
      %s17 = sadd.s32 %s10, 1
      %s18 = ssub.s32 %s10, %s17
      %p19 = scmp.eq.s32.totalorder %s18, 0
      %s21 = sadd.s32 %s20, 1
      %s22 = scalar_select %p19, %s20, %s21
      %p25 = pneg %p19
      %p26 = scmp.eq.s32.totalorder %s10, 1
      %p27 = por %p25, %p26
      %p28 = scmp.ne.s32.totalorder %s20, %s23
      %p29 = scmp.eq.s32.totalorder %s10, 0
      %p30 = por %p28, %p29
      %p31 = scmp.ne.s32.totalorder %s20, %s23
      %p32 = scmp.eq.s32.totalorder %s15, 1
      %p33 = por %p31, %p32
      %p34 = scmp.ne.s32.totalorder %s23, %s24
      %p35 = scmp.eq.s32.totalorder %s15, 0
      %p36 = por %p34, %p35
      %p37 = scmp.ne.s32.totalorder %s23, %s24
      %p38 = scmp.eq.s32.totalorder %s16, 1
      %p39 = por %p37, %p38
      %p41 = scmp.ne.s32.totalorder %s24, %s40
      %p42 = scmp.eq.s32.totalorder %s16, 0
      %p43 = por %p41, %p42
      %s45 = sadd.s32 %s44, 1
      %p48 = scmp.eq.s32.totalorder %s10, 1
      %p49 = scmp.ne.s32.totalorder %s44, %s46
      %p50 = scmp.eq.s32.totalorder %s10, 0
      %p51 = por %p49, %p50
      %p52 = scmp.ne.s32.totalorder %s44, %s46
      %p53 = scmp.eq.s32.totalorder %s15, 1
      %p54 = por %p52, %p53
      %p55 = scmp.ne.s32.totalorder %s46, %s47
      %p56 = scmp.eq.s32.totalorder %s15, 0
      %p57 = por %p55, %p56
      %p58 = scmp.ne.s32.totalorder %s46, %s47
      %p59 = scmp.eq.s32.totalorder %s16, 1
      %p60 = por %p58, %p59
      %p62 = scmp.ne.s32.totalorder %s47, %s61
      %p63 = scmp.eq.s32.totalorder %s16, 0
      %p64 = por %p62, %p63
      %s65 = ssub.s32 %s10, %s17
      %p66 = scmp.eq.s32.totalorder %s65, 0
      %s68 = sadd.s32 %s67, 1
      %s69 = scalar_select %p66, %s67, %s68
      %p72 = pneg %p66
      %p73 = scmp.eq.s32.totalorder %s10, 1
      %p74 = por %p72, %p73
      %p75 = scmp.ne.s32.totalorder %s67, %s70
      %p76 = scmp.eq.s32.totalorder %s10, 0
      %p77 = por %p75, %p76
      %p78 = scmp.ne.s32.totalorder %s67, %s70
      %p79 = scmp.eq.s32.totalorder %s15, 1
      %p80 = por %p78, %p79
      %p81 = scmp.ne.s32.totalorder %s70, %s71
      %p82 = scmp.eq.s32.totalorder %s15, 0
      %p83 = por %p81, %p82
      %p84 = scmp.ne.s32.totalorder %s70, %s71
      %p85 = scmp.eq.s32.totalorder %s16, 1
      %p86 = por %p84, %p85
      %p88 = scmp.ne.s32.totalorder %s71, %s87
      %p89 = scmp.eq.s32.totalorder %s16, 0
      %p90 = por %p88, %p89
      %s91 = ssub.s32 %s10, %s17
      %p92 = scmp.eq.s32.totalorder %s91, 0
      %s94 = sadd.s32 %s93, 1
      %s95 = scalar_select %p92, %s93, %s94
      %p98 = pneg %p92
      %p99 = scmp.eq.s32.totalorder %s10, 1
      %p100 = por %p98, %p99
      %p101 = scmp.ne.s32.totalorder %s93, %s96
      %p102 = scmp.eq.s32.totalorder %s10, 0
      %p103 = por %p101, %p102
      %p104 = scmp.ne.s32.totalorder %s93, %s96
      %p105 = scmp.eq.s32.totalorder %s15, 1
      %p106 = por %p104, %p105
      %p107 = scmp.ne.s32.totalorder %s96, %s97
      %p108 = scmp.eq.s32.totalorder %s15, 0
      %p109 = por %p107, %p108
      %p110 = scmp.ne.s32.totalorder %s96, %s97
      %p111 = scmp.eq.s32.totalorder %s16, 1
      %p112 = por %p110, %p111
      %p114 = scmp.ne.s32.totalorder %s97, %s113
      %p115 = scmp.eq.s32.totalorder %s16, 0
      %p116 = por %p114, %p115
      %p117 = scmp.le.s32.totalorder 1, %s10
      %p118 = scmp.lt.s32.totalorder %s10, 3
      %p119 = pnand %p117, %p118
      %p120 = pneg %p119
      // Predicated region
      $region9: #{part_iwt3_forward.6} parent=5 // pred_check
        _
      $region10: #{part_iwt3_forward.6} parent=5 // pred_check_branch
        %122 = sbr.rel (%p119) target = $region12
      $region11: #{part_iwt3_forward.6} parent=5 // pred_region
        %s123 = ssub.s32 %s10, 1
        // Predicated region
        $region13: #{part_iwt3_forward.6} parent=11 // pred_check
          %p124 = pneg %p57
        $region14: #{part_iwt3_forward.6} parent=11 // pred_check_branch
          %126 = sbr.rel (%p124) target = $region16
        $region15: #{part_iwt3_forward.6} parent=11 // pred_region
          _
        $region16: #{part_iwt3_forward.6} parent=11 // pred_fallthru
          _
      $region12: #{part_iwt3_forward.6} parent=5 // pred_fallthru
        _
      %p127 = scmp.lt.s32.totalorder %s10, 2
      // Predicated region
      $region17: #{part_iwt3_forward.6} parent=5 // pred_check
        %p128 = pneg %p127
      $region18: #{part_iwt3_forward.6} parent=5 // pred_check_branch
        %130 = sbr.rel (%p128) target = $region20
      $region19: #{part_iwt3_forward.6} parent=5 // pred_region
        // Predicated region
        $region21: #{part_iwt3_forward.6} parent=19 // pred_check
          %p131 = pneg %p30
        $region22: #{part_iwt3_forward.6} parent=19 // pred_check_branch
          %133 = sbr.rel (%p131) target = $region24
        $region23: #{part_iwt3_forward.6} parent=19 // pred_region
          %s134 = sand.u32 %s20, 1
          %s135 = sand.u32 %s20, 1
          %s136 = smul.addr %s135, 144
          %s137 = scalar_lea.vmem [#allocation2], %s136
          %s138 = smul.u32 2, %s10
          %s139 = smul.addr %s138, 4
          %s140 = scalar_lea.vmem %s0, %s139
          // Predicated region
          $region25: #{part_iwt3_forward.6} parent=23 // pred_check
            _
          $region26: #{part_iwt3_forward.6} parent=23 // pred_check_branch
            %142 = sbr.rel (0) target = $region28
          $region27: #{part_iwt3_forward.6} parent=23 // pred_region
            // Predicated region
            $region29: #{part_iwt3_forward.6} parent=27 // pred_check
              _
            $region30: #{part_iwt3_forward.6} parent=27 // pred_check_branch
              %144 = sbr.rel (0) target = $region32
            $region31: #{part_iwt3_forward.6} parent=27 // pred_region
              // Predicated region
              $region44: #{part_iwt3_forward.6} parent=31 // pred_check
                _
              $region45: #{part_iwt3_forward.6} parent=31 // pred_check_branch
                %194 = sbr.rel (0) target = $region47
              $region46: #{part_iwt3_forward.6} parent=31 // pred_region
                loop: start=0, step=1, limit=1
                $region48: #{part_iwt3_forward.6} parent=46 // loop_pre_header
                  _
                $region49: #{part_iwt3_forward.6} parent=46 // loop_header
                  %s196 = sphi 0, %s200
                  %p197 = scmp.ge.s32.totalorder %s196, 1
                  %s201 = sphi %s140, %s140
                  %s202 = sphi %s137, %s137
                $region50: #{part_iwt3_forward.6} parent=46 // loop_header_branch
                  %199 = sbr.rel (%p197) target = $region54
                $region51: #{part_iwt3_forward.6} parent=46 // loop_body
                  %v203 = vld [vmem:[%s201] sm:$0xff]
                  %204 = vst [vmem:[%s202] sm:$0xff] %v203
                  %v205 = vld [vmem:[%s201 + $0x10] sm:$0xff]
                  %206 = vst [vmem:[%s202 + $0x8] sm:$0xff] %v205
                  %v207 = vld [vmem:[%s201 + $0x20] sm:$0xff]
                  %208 = vst [vmem:[%s202 + $0x10] sm:$0xff] %v207
                  %v209 = vld [vmem:[%s201 + $0x30] sm:$0xff]
                  %210 = vst [vmem:[%s202 + $0x18] sm:$0xff] %v209
                  %v211 = vld [vmem:[%s201 + $0x40] sm:$0xff]
                  %212 = vst [vmem:[%s202 + $0x20] sm:$0xff] %v211
                  %v213 = vld [vmem:[%s201 + $0x50] sm:$0xff]
                  %214 = vst [vmem:[%s202 + $0x28] sm:$0xff] %v213
                  %v215 = vld [vmem:[%s201 + $0x60] sm:$0xff]
                  %216 = vst [vmem:[%s202 + $0x30] sm:$0xff] %v215
                  %v217 = vld [vmem:[%s201 + $0x70] sm:$0xff]
                  %218 = vst [vmem:[%s202 + $0x38] sm:$0xff] %v217
                  %v219 = vld [vmem:[%s201 + $0x80] sm:$0xff]
                  %220 = vst [vmem:[%s202 + $0x40] sm:$0xff] %v219
                  %v221 = vld [vmem:[%s201 + $0x90] sm:$0xff]
                  %222 = vst [vmem:[%s202 + $0x48] sm:$0xff] %v221
                  %v223 = vld [vmem:[%s201 + $0xa0] sm:$0xff]
                  %224 = vst [vmem:[%s202 + $0x50] sm:$0xff] %v223
                  %v225 = vld [vmem:[%s201 + $0xb0] sm:$0xff]
                  %226 = vst [vmem:[%s202 + $0x58] sm:$0xff] %v225
                  %v227 = vld [vmem:[%s201 + $0xc0] sm:$0xff]
                  %228 = vst [vmem:[%s202 + $0x60] sm:$0xff] %v227
                  %v229 = vld [vmem:[%s201 + $0xd0] sm:$0xff]
                  %230 = vst [vmem:[%s202 + $0x68] sm:$0xff] %v229
                  %v231 = vld [vmem:[%s201 + $0xe0] sm:$0xff]
                  %232 = vst [vmem:[%s202 + $0x70] sm:$0xff] %v231
                  %v233 = vld [vmem:[%s201 + $0xf0] sm:$0xff]
                  %234 = vst [vmem:[%s202 + $0x78] sm:$0xff] %v233
                  %v235 = vld [vmem:[%s201 + $0x100] sm:$0xff]
                  %236 = vst [vmem:[%s202 + $0x80] sm:$0xff] %v235
                  %v237 = vld [vmem:[%s201 + $0x110] sm:$0xff]
                  %238 = vst [vmem:[%s202 + $0x88] sm:$0xff] %v237
                $region52: #{part_iwt3_forward.6} parent=46 // loop_footer
                  %s200 = sadd.s32 1, %s196
                $region53: #{part_iwt3_forward.6} parent=46 // loop_footer_branch
                  %195 = sbr.rel target = $region49
                $region54: #{part_iwt3_forward.6} parent=46 // loop_exit
                  _
              $region47: #{part_iwt3_forward.6} parent=31 // pred_fallthru
                _
              // Predicated region
              $region55: #{part_iwt3_forward.6} parent=31 // pred_check
                _
              $region56: #{part_iwt3_forward.6} parent=31 // pred_check_branch
                %240 = sbr.rel target = $region58
              $region57: #{part_iwt3_forward.6} parent=31 // pred_region
                _
              $region58: #{part_iwt3_forward.6} parent=31 // pred_fallthru
                _
            $region32: #{part_iwt3_forward.6} parent=27 // pred_fallthru
              _
            // Predicated region
            $region33: #{part_iwt3_forward.6} parent=27 // pred_check
              _
            $region34: #{part_iwt3_forward.6} parent=27 // pred_check_branch
              %146 = sbr.rel target = $region36
            $region35: #{part_iwt3_forward.6} parent=27 // pred_region
              %s148 = ssub.s32 256, 1
              loop: start=0, step=1, limit=1
              $region37: #{part_iwt3_forward.6} parent=35 // loop_pre_header
                _
              $region38: #{part_iwt3_forward.6} parent=35 // loop_header
                %s150 = sphi 0, %s154
                %p151 = scmp.ge.s32.totalorder %s150, 1
                %s155 = sphi %s140, %s140
                %s156 = sphi %s137, %s137
              $region39: #{part_iwt3_forward.6} parent=35 // loop_header_branch
                %153 = sbr.rel (%p151) target = $region43
              $region40: #{part_iwt3_forward.6} parent=35 // loop_body
                %v157 = vld [vmem:[%s155] sm:%s148]
                %158 = vst [vmem:[%s156] sm:%s148] %v157
                %v159 = vld [vmem:[%s155 + $0x10] sm:%s148]
                %160 = vst [vmem:[%s156 + $0x8] sm:%s148] %v159
                %v161 = vld [vmem:[%s155 + $0x20] sm:%s148]
                %162 = vst [vmem:[%s156 + $0x10] sm:%s148] %v161
                %v163 = vld [vmem:[%s155 + $0x30] sm:%s148]
                %164 = vst [vmem:[%s156 + $0x18] sm:%s148] %v163
                %v165 = vld [vmem:[%s155 + $0x40] sm:%s148]
                %166 = vst [vmem:[%s156 + $0x20] sm:%s148] %v165
                %v167 = vld [vmem:[%s155 + $0x50] sm:%s148]
                %168 = vst [vmem:[%s156 + $0x28] sm:%s148] %v167
                %v169 = vld [vmem:[%s155 + $0x60] sm:%s148]
                %170 = vst [vmem:[%s156 + $0x30] sm:%s148] %v169
                %v171 = vld [vmem:[%s155 + $0x70] sm:%s148]
                %172 = vst [vmem:[%s156 + $0x38] sm:%s148] %v171
                %v173 = vld [vmem:[%s155 + $0x80] sm:%s148]
                %174 = vst [vmem:[%s156 + $0x40] sm:%s148] %v173
                %v175 = vld [vmem:[%s155 + $0x90] sm:%s148]
                %176 = vst [vmem:[%s156 + $0x48] sm:%s148] %v175
                %v177 = vld [vmem:[%s155 + $0xa0] sm:%s148]
                %178 = vst [vmem:[%s156 + $0x50] sm:%s148] %v177
                %v179 = vld [vmem:[%s155 + $0xb0] sm:%s148]
                %180 = vst [vmem:[%s156 + $0x58] sm:%s148] %v179
                %v181 = vld [vmem:[%s155 + $0xc0] sm:%s148]
                %182 = vst [vmem:[%s156 + $0x60] sm:%s148] %v181
                %v183 = vld [vmem:[%s155 + $0xd0] sm:%s148]
                %184 = vst [vmem:[%s156 + $0x68] sm:%s148] %v183
                %v185 = vld [vmem:[%s155 + $0xe0] sm:%s148]
                %186 = vst [vmem:[%s156 + $0x70] sm:%s148] %v185
                %v187 = vld [vmem:[%s155 + $0xf0] sm:%s148]
                %188 = vst [vmem:[%s156 + $0x78] sm:%s148] %v187
                %v189 = vld [vmem:[%s155 + $0x100] sm:%s148]
                %190 = vst [vmem:[%s156 + $0x80] sm:%s148] %v189
                %v191 = vld [vmem:[%s155 + $0x110] sm:%s148]
                %192 = vst [vmem:[%s156 + $0x88] sm:%s148] %v191
              $region41: #{part_iwt3_forward.6} parent=35 // loop_footer
                %s154 = sadd.s32 1, %s150
              $region42: #{part_iwt3_forward.6} parent=35 // loop_footer_branch
                %149 = sbr.rel target = $region38
              $region43: #{part_iwt3_forward.6} parent=35 // loop_exit
                _
            $region36: #{part_iwt3_forward.6} parent=27 // pred_fallthru
              _
          $region28: #{part_iwt3_forward.6} parent=23 // pred_fallthru
            _
          %241 = vnop
        $region24: #{part_iwt3_forward.6} parent=19 // pred_fallthru
          _
      $region20: #{part_iwt3_forward.6} parent=5 // pred_fallthru
        _
      %p242 = scmp.le.s32.totalorder 1, %s10
      %p243 = scmp.lt.s32.totalorder %s10, 3
      %p244 = pnand %p242, %p243
      %p245 = pneg %p244
      // Predicated region
      $region59: #{part_iwt3_forward.6} parent=5 // pred_check
        _
      $region60: #{part_iwt3_forward.6} parent=5 // pred_check_branch
        %247 = sbr.rel (%p244) target = $region62
      $region61: #{part_iwt3_forward.6} parent=5 // pred_region
        %s248 = ssub.s32 %s10, 1
        %s249 = sand.u32 %s23, 1
        %s250 = sand.u32 %s23, 1
        %s251 = smul.addr %s250, 144
        %s252 = scalar_lea.vmem [#allocation2], %s251
        // Predicated region
        $region63: #{part_iwt3_forward.6} parent=61 // pred_check
          %p253 = pneg %p36
        $region64: #{part_iwt3_forward.6} parent=61 // pred_check_branch
          %255 = sbr.rel (%p253) target = $region66
        $region65: #{part_iwt3_forward.6} parent=61 // pred_region
          _
        $region66: #{part_iwt3_forward.6} parent=61 // pred_fallthru
          _
        %s256 = sand.u32 %s23, 1
        %s257 = sand.u32 %s23, 1
        %s258 = smul.addr %s257, 144
        %s259 = scalar_lea.vmem [#allocation2], %s258
        %p260 = pneg %p36
        %p261 = pneg %p33
        %p262 = pneg %p57
        %p263 = pneg %p54
        %p264 = pneg %p83
        %p265 = pneg %p80
        %s266 = sand.u32 %s70, 1
        %s267 = sand.u32 %s70, 1
        %s268 = smul.addr %s267, 16
        %s269 = scalar_lea.vmem [#allocation3], %s268
        %p270 = pneg %p109
        %p271 = pneg %p106
        %s272 = sand.u32 %s96, 1
        %s273 = sand.u32 %s96, 1
        %s274 = smul.addr %s273, 16
        %s275 = scalar_lea.vmem [#allocation4], %s274
        %s276 = smul.u32 2, %s15
        %s277 = smul.u32 2, %s15
        %v279 = vld [vmem:[%s1] sm:$0xff]
        %v280 = vld [vmem:[%s1 + $0x8] sm:$0xff]
        %v281 = vld [vmem:[%s252] sm:$0xff]
        %v282 = vld [vmem:[%s252 + $0x8] sm:$0xff]
        %v283 = vld [vmem:[%s252 + $0x10] sm:$0xff]
        %v284 = vld [vmem:[%s252 + $0x18] sm:$0xff]
        %v285 = vld [vmem:[%s252 + $0x20] sm:$0xff]
        %v286 = vld [vmem:[%s252 + $0x28] sm:$0xff]
        %v287 = vld [vmem:[%s252 + $0x30] sm:$0xff]
        %v288 = vld [vmem:[%s252 + $0x38] sm:$0xff]
        %v289 = vld [vmem:[%s252 + $0x40] sm:$0xff]
        %v290 = vld [vmem:[%s252 + $0x48] sm:$0xff]
        %v291 = vld [vmem:[%s252 + $0x50] sm:$0xff]
        %v292 = vld [vmem:[%s252 + $0x58] sm:$0xff]
        %v293 = vld [vmem:[%s252 + $0x60] sm:$0xff]
        %v294 = vld [vmem:[%s252 + $0x68] sm:$0xff]
        %v295 = vld [vmem:[%s252 + $0x70] sm:$0xff]
        %v296 = vld [vmem:[%s252 + $0x78] sm:$0xff]
        %v297 = vld [vmem:[%s252 + $0x80] sm:$0xff]
        %v298 = vld [vmem:[%s252 + $0x88] sm:$0xff]
        %v301 = vunpack.c.l.b16 %v279
        %v302 = vunpack.c.h.b16 %v279
        %v303 = vunpack.c.l.b16 %v280
        %v304 = vunpack.c.h.b16 %v280
        %v305 = vpack.c.b16 %v303, %v301
        %v306 = vpack.c.b16 %v304, %v302
        %v326 = vunpack.c.l.b16 %v281
        %v327 = vunpack.c.h.b16 %v281
        %v328 = vunpack.c.l.b16 %v282
        %v329 = vunpack.c.h.b16 %v282
        %v330 = vunpack.c.l.b16 %v283
        %v331 = vunpack.c.h.b16 %v283
        %v332 = vunpack.c.l.b16 %v284
        %v333 = vunpack.c.h.b16 %v284
        %v334 = vunpack.c.l.b16 %v285
        %v335 = vunpack.c.h.b16 %v285
        %v336 = vunpack.c.l.b16 %v286
        %v337 = vunpack.c.h.b16 %v286
        %v338 = vunpack.c.l.b16 %v287
        %v339 = vunpack.c.h.b16 %v287
        %v340 = vunpack.c.l.b16 %v288
        %v341 = vunpack.c.h.b16 %v288
        %v342 = vunpack.c.l.b16 %v289
        %v343 = vunpack.c.h.b16 %v289
        %v344 = vunpack.c.l.b16 %v290
        %v345 = vunpack.c.h.b16 %v290
        %v346 = vunpack.c.l.b16 %v291
        %v347 = vunpack.c.h.b16 %v291
        %v348 = vunpack.c.l.b16 %v292
        %v349 = vunpack.c.h.b16 %v292
        %v350 = vunpack.c.l.b16 %v293
        %v351 = vunpack.c.h.b16 %v293
        %v352 = vunpack.c.l.b16 %v294
        %v353 = vunpack.c.h.b16 %v294
        %v354 = vunpack.c.l.b16 %v295
        %v355 = vunpack.c.h.b16 %v295
        %v356 = vunpack.c.l.b16 %v296
        %v357 = vunpack.c.h.b16 %v296
        %v358 = vunpack.c.l.b16 %v297
        %v359 = vunpack.c.h.b16 %v297
        %v360 = vunpack.c.l.b16 %v298
        %v361 = vunpack.c.h.b16 %v298
        %v362 = vpack.c.b16 %v328, %v326
        %v363 = vpack.c.b16 %v329, %v327
        %v364 = vpack.c.b16 %v332, %v330
        %v365 = vpack.c.b16 %v333, %v331
        %v366 = vpack.c.b16 %v336, %v334
        %v367 = vpack.c.b16 %v337, %v335
        %v368 = vpack.c.b16 %v340, %v338
        %v369 = vpack.c.b16 %v341, %v339
        %v370 = vpack.c.b16 %v344, %v342
        %v371 = vpack.c.b16 %v345, %v343
        %v372 = vpack.c.b16 %v348, %v346
        %v373 = vpack.c.b16 %v349, %v347
        %v374 = vpack.c.b16 %v352, %v350
        %v375 = vpack.c.b16 %v353, %v351
        %v376 = vpack.c.b16 %v356, %v354
        %v377 = vpack.c.b16 %v357, %v355
        %v378 = vpack.c.b16 %v360, %v358
        %v379 = vpack.c.b16 %v361, %v359
        %vm398 = vcmask 130048
        %v400 = vsel %vm398, %v306, 0
        %402 = vmatprep.subr.bf16.mxu0 %v377
        %403 = vmatpush1.bf16.msra.mxu0 %v376
        %404 = vmatprep.subr.bf16.mxu0 %v375
        %405 = vmatpush1.bf16.msra.mxu0 %v374
        %406 = vmatprep.subr.bf16.mxu0 %v373
        %407 = vmatpush1.bf16.msra.mxu0 %v372
        %408 = vmatprep.subr.bf16.mxu0 %v371
        %409 = vmatpush1.bf16.msra.mxu0 %v370
        %410 = vmatprep.subr.bf16.mxu0 %v369
        %411 = vmatpush1.bf16.msra.mxu0 %v368
        %412 = vmatprep.subr.bf16.mxu0 %v367
        %413 = vmatpush1.bf16.msra.mxu0 %v366
        %414 = vmatprep.subr.bf16.mxu0 %v365
        %415 = vmatpush1.bf16.msra.mxu0 %v364
        %416 = vmatprep.subr.bf16.mxu0 %v363
        %417 = vmatpush1.bf16.msra.mxu0 %v362
        %418 = vmatprep.subr.bf16.mxu0 0
        %419 = vmatpush2.bf16.msra.mxu0 0
        %420 = vmatprep.subr.bf16.mxu0 0
        %421 = vmatpush2.bf16.msra.mxu0 0
        %422 = vmatprep.subr.bf16.mxu0 0
        %423 = vmatpush2.bf16.msra.mxu0 0
        %424 = vmatprep.subr.bf16.mxu0 0
        %425 = vmatpush2.bf16.msra.mxu0 0
        %426 = vmatprep.subr.bf16.mxu0 0
        %427 = vmatpush2.bf16.msra.mxu0 0
        %428 = vmatprep.subr.bf16.mxu0 0
        %429 = vmatpush2.bf16.msra.mxu0 0
        %430 = vmatprep.subr.bf16.mxu0 0
        %431 = vmatpush2.bf16.msra.mxu0 0
        %432 = vmatprep.subr.bf16.mxu0 %v379
        %433 = vmatpush2.bf16.msra.mxu0 %v378
        %434 = vmatprep.mubr.bf16.mxu0 %v400
        %435 = vmatmul.mubr.bf16.gmra.mxu0 %v305
        %v436 = vpop.f32.mrf.mxu0
        %v437 = vadd.f32 0.0, %v436
        %v438 = vpop.f32.mrf.mxu0
        %v439 = vadd.f32 0.0, %v438
        %v440 = vpop.f32.mrf.mxu0
        %v441 = vadd.f32 0.0, %v440
        %v442 = vpop.f32.mrf.mxu0
        %v443 = vadd.f32 0.0, %v442
        %444 = vdwg.mxu0
        %v445 = vpack.c.bf16 %v441, %v437
        %v446 = vpack.c.bf16 %v443, %v439
        %v449 = vunpack.c.l.b16 %v445
        %v450 = vunpack.c.l.b16 %v446
        %v451 = vunpack.c.h.b16 %v445
        %v452 = vunpack.c.h.b16 %v446
        %v453 = vpack.c.b16 %v450, %v449
        %v454 = vpack.c.b16 %v452, %v451
        %457 = vst [vmem:[%s269] sm:$0xff] %v453
        %458 = vst [vmem:[%s269 + $0x8] sm:$0xff] %v454
        %459 = vst [vmem:[%s275] sm:$0xff] 0.0
        %460 = vst [vmem:[%s275 + $0x8] sm:$0xff] 0.0
        %v461 = vadd.f32 %v437, %v439
        %462 = vadd.xlane.f32.xlu0 %v461
        %v463 = vpop.xlane.xlu0 %462
        %v464 = vadd.f32 %v441, %v443
        %465 = vadd.xlane.f32.xlu0 %v464
        %v466 = vpop.xlane.xlu0 %465
        %vm467 = vcmask 7168
        %468 = vst.msk [vmem:[%s275] sm:$0xff] %vm467, %v463
        %469 = vst.msk [vmem:[%s275 + $0x8] sm:$0xff] %vm467, %v466
        %v470 = vmul.f32 %v437, %v437
        %v471 = vmul.f32 %v439, %v439
        %v472 = vmul.f32 %v441, %v441
        %v473 = vmul.f32 %v443, %v443
        %v474 = vadd.f32 %v470, %v471
        %475 = vadd.xlane.f32.xlu0 %v474
        %v476 = vpop.xlane.xlu0 %475
        %v477 = vadd.f32 %v472, %v473
        %478 = vadd.xlane.f32.xlu0 %v477
        %v479 = vpop.xlane.xlu0 %478
        %vm480 = vcmask 15368
        %481 = vst.msk [vmem:[%s275] sm:$0xff] %vm480, %v476
        %482 = vst.msk [vmem:[%s275 + $0x8] sm:$0xff] %vm480, %v479
        %s483 = sand.u32 %s70, 1
        %s484 = sand.u32 %s70, 1
        %s485 = smul.addr %s484, 16
        %s486 = scalar_lea.vmem [#allocation3], %s485
        %s487 = sand.u32 %s96, 1
        %s488 = sand.u32 %s96, 1
        %s489 = smul.addr %s488, 16
        %s490 = scalar_lea.vmem [#allocation4], %s489
        // Predicated region
        $region67: #{part_iwt3_forward.6} parent=61 // pred_check
          %p491 = pneg %p80
        $region68: #{part_iwt3_forward.6} parent=61 // pred_check_branch
          %493 = sbr.rel (%p491) target = $region70
        $region69: #{part_iwt3_forward.6} parent=61 // pred_region
          %s494 = smul.u32 2, %s15
          %s495 = smul.addr %s494, 4
          %s496 = scalar_lea.vmem %s2, %s495
          // Predicated region
          $region71: #{part_iwt3_forward.6} parent=69 // pred_check
            _
          $region72: #{part_iwt3_forward.6} parent=69 // pred_check_branch
            %498 = sbr.rel (0) target = $region74
          $region73: #{part_iwt3_forward.6} parent=69 // pred_region
            // Predicated region
            $region75: #{part_iwt3_forward.6} parent=73 // pred_check
              _
            $region76: #{part_iwt3_forward.6} parent=73 // pred_check_branch
              %500 = sbr.rel (0) target = $region78
            $region77: #{part_iwt3_forward.6} parent=73 // pred_region
              // Predicated region
              $region90: #{part_iwt3_forward.6} parent=77 // pred_check
                _
              $region91: #{part_iwt3_forward.6} parent=77 // pred_check_branch
                %518 = sbr.rel (0) target = $region93
              $region92: #{part_iwt3_forward.6} parent=77 // pred_region
                loop: start=0, step=1, limit=1
                $region94: #{part_iwt3_forward.6} parent=92 // loop_pre_header
                  _
                $region95: #{part_iwt3_forward.6} parent=92 // loop_header
                  %s520 = sphi 0, %s524
                  %p521 = scmp.ge.s32.totalorder %s520, 1
                  %s525 = sphi %s486, %s486
                  %s526 = sphi %s496, %s496
                $region96: #{part_iwt3_forward.6} parent=92 // loop_header_branch
                  %523 = sbr.rel (%p521) target = $region100
                $region97: #{part_iwt3_forward.6} parent=92 // loop_body
                  %v527 = vld [vmem:[%s525] sm:$0xff]
                  %528 = vst [vmem:[%s526] sm:$0xff] %v527
                  %v529 = vld [vmem:[%s525 + $0x8] sm:$0xff]
                  %530 = vst [vmem:[%s526 + $0x10] sm:$0xff] %v529
                $region98: #{part_iwt3_forward.6} parent=92 // loop_footer
                  %s524 = sadd.s32 1, %s520
                $region99: #{part_iwt3_forward.6} parent=92 // loop_footer_branch
                  %519 = sbr.rel target = $region95
                $region100: #{part_iwt3_forward.6} parent=92 // loop_exit
                  _
              $region93: #{part_iwt3_forward.6} parent=77 // pred_fallthru
                _
              // Predicated region
              $region101: #{part_iwt3_forward.6} parent=77 // pred_check
                _
              $region102: #{part_iwt3_forward.6} parent=77 // pred_check_branch
                %532 = sbr.rel target = $region104
              $region103: #{part_iwt3_forward.6} parent=77 // pred_region
                _
              $region104: #{part_iwt3_forward.6} parent=77 // pred_fallthru
                _
            $region78: #{part_iwt3_forward.6} parent=73 // pred_fallthru
              _
            // Predicated region
            $region79: #{part_iwt3_forward.6} parent=73 // pred_check
              _
            $region80: #{part_iwt3_forward.6} parent=73 // pred_check_branch
              %502 = sbr.rel target = $region82
            $region81: #{part_iwt3_forward.6} parent=73 // pred_region
              %s504 = ssub.s32 256, 1
              loop: start=0, step=1, limit=1
              $region83: #{part_iwt3_forward.6} parent=81 // loop_pre_header
                _
              $region84: #{part_iwt3_forward.6} parent=81 // loop_header
                %s506 = sphi 0, %s510
                %p507 = scmp.ge.s32.totalorder %s506, 1
                %s511 = sphi %s486, %s486
                %s512 = sphi %s496, %s496
              $region85: #{part_iwt3_forward.6} parent=81 // loop_header_branch
                %509 = sbr.rel (%p507) target = $region89
              $region86: #{part_iwt3_forward.6} parent=81 // loop_body
                %v513 = vld [vmem:[%s511] sm:%s504]
                %514 = vst [vmem:[%s512] sm:%s504] %v513
                %v515 = vld [vmem:[%s511 + $0x8] sm:%s504]
                %516 = vst [vmem:[%s512 + $0x10] sm:%s504] %v515
              $region87: #{part_iwt3_forward.6} parent=81 // loop_footer
                %s510 = sadd.s32 1, %s506
              $region88: #{part_iwt3_forward.6} parent=81 // loop_footer_branch
                %505 = sbr.rel target = $region84
              $region89: #{part_iwt3_forward.6} parent=81 // loop_exit
                _
            $region82: #{part_iwt3_forward.6} parent=73 // pred_fallthru
              _
          $region74: #{part_iwt3_forward.6} parent=69 // pred_fallthru
            _
          %533 = vnop
        $region70: #{part_iwt3_forward.6} parent=61 // pred_fallthru
          _
        // Predicated region
        $region105: #{part_iwt3_forward.6} parent=61 // pred_check
          %p534 = pneg %p106
        $region106: #{part_iwt3_forward.6} parent=61 // pred_check_branch
          %536 = sbr.rel (%p534) target = $region108
        $region107: #{part_iwt3_forward.6} parent=61 // pred_region
          %s537 = smul.addr %s15, 8
          %s538 = scalar_lea.vmem %s3, %s537
          // Predicated region
          $region109: #{part_iwt3_forward.6} parent=107 // pred_check
            _
          $region110: #{part_iwt3_forward.6} parent=107 // pred_check_branch
            %540 = sbr.rel (0) target = $region112
          $region111: #{part_iwt3_forward.6} parent=107 // pred_region
            // Predicated region
            $region113: #{part_iwt3_forward.6} parent=111 // pred_check
              _
            $region114: #{part_iwt3_forward.6} parent=111 // pred_check_branch
              %542 = sbr.rel (0) target = $region116
            $region115: #{part_iwt3_forward.6} parent=111 // pred_region
              // Predicated region
              $region128: #{part_iwt3_forward.6} parent=115 // pred_check
                _
              $region129: #{part_iwt3_forward.6} parent=115 // pred_check_branch
                %560 = sbr.rel (0) target = $region131
              $region130: #{part_iwt3_forward.6} parent=115 // pred_region
                loop: start=0, step=1, limit=1
                $region132: #{part_iwt3_forward.6} parent=130 // loop_pre_header
                  _
                $region133: #{part_iwt3_forward.6} parent=130 // loop_header
                  %s562 = sphi 0, %s566
                  %p563 = scmp.ge.s32.totalorder %s562, 1
                  %s567 = sphi %s490, %s490
                  %s568 = sphi %s538, %s538
                $region134: #{part_iwt3_forward.6} parent=130 // loop_header_branch
                  %565 = sbr.rel (%p563) target = $region138
                $region135: #{part_iwt3_forward.6} parent=130 // loop_body
                  %v569 = vld [vmem:[%s567] sm:$0xff]
                  %570 = vst [vmem:[%s568] sm:$0xff] %v569
                  %v571 = vld [vmem:[%s567 + $0x8] sm:$0xff]
                  %572 = vst [vmem:[%s568 + $0x10] sm:$0xff] %v571
                $region136: #{part_iwt3_forward.6} parent=130 // loop_footer
                  %s566 = sadd.s32 1, %s562
                $region137: #{part_iwt3_forward.6} parent=130 // loop_footer_branch
                  %561 = sbr.rel target = $region133
                $region138: #{part_iwt3_forward.6} parent=130 // loop_exit
                  _
              $region131: #{part_iwt3_forward.6} parent=115 // pred_fallthru
                _
              // Predicated region
              $region139: #{part_iwt3_forward.6} parent=115 // pred_check
                _
              $region140: #{part_iwt3_forward.6} parent=115 // pred_check_branch
                %574 = sbr.rel target = $region142
              $region141: #{part_iwt3_forward.6} parent=115 // pred_region
                _
              $region142: #{part_iwt3_forward.6} parent=115 // pred_fallthru
                _
            $region116: #{part_iwt3_forward.6} parent=111 // pred_fallthru
              _
            // Predicated region
            $region117: #{part_iwt3_forward.6} parent=111 // pred_check
              _
            $region118: #{part_iwt3_forward.6} parent=111 // pred_check_branch
              %544 = sbr.rel target = $region120
            $region119: #{part_iwt3_forward.6} parent=111 // pred_region
              %s546 = ssub.s32 256, 1
              loop: start=0, step=1, limit=1
              $region121: #{part_iwt3_forward.6} parent=119 // loop_pre_header
                _
              $region122: #{part_iwt3_forward.6} parent=119 // loop_header
                %s548 = sphi 0, %s552
                %p549 = scmp.ge.s32.totalorder %s548, 1
                %s553 = sphi %s490, %s490
                %s554 = sphi %s538, %s538
              $region123: #{part_iwt3_forward.6} parent=119 // loop_header_branch
                %551 = sbr.rel (%p549) target = $region127
              $region124: #{part_iwt3_forward.6} parent=119 // loop_body
                %v555 = vld [vmem:[%s553] sm:%s546]
                %556 = vst [vmem:[%s554] sm:%s546] %v555
                %v557 = vld [vmem:[%s553 + $0x8] sm:%s546]
                %558 = vst [vmem:[%s554 + $0x10] sm:%s546] %v557
              $region125: #{part_iwt3_forward.6} parent=119 // loop_footer
                %s552 = sadd.s32 1, %s548
              $region126: #{part_iwt3_forward.6} parent=119 // loop_footer_branch
                %547 = sbr.rel target = $region122
              $region127: #{part_iwt3_forward.6} parent=119 // loop_exit
                _
            $region120: #{part_iwt3_forward.6} parent=111 // pred_fallthru
              _
          $region112: #{part_iwt3_forward.6} parent=107 // pred_fallthru
            _
          %575 = vnop
        $region108: #{part_iwt3_forward.6} parent=61 // pred_fallthru
          _
      $region62: #{part_iwt3_forward.6} parent=5 // pred_fallthru
        _
      %p576 = scmp.le.s32.totalorder 2, %s10
      // Predicated region
      $region143: #{part_iwt3_forward.6} parent=5 // pred_check
        %p577 = pneg %p576
      $region144: #{part_iwt3_forward.6} parent=5 // pred_check_branch
        %579 = sbr.rel (%p577) target = $region146
      $region145: #{part_iwt3_forward.6} parent=5 // pred_region
        %s580 = ssub.s32 %s10, 2
        // Predicated region
        $region147: #{part_iwt3_forward.6} parent=145 // pred_check
          %p581 = pneg %p86
        $region148: #{part_iwt3_forward.6} parent=145 // pred_check_branch
          %583 = sbr.rel (%p581) target = $region150
        $region149: #{part_iwt3_forward.6} parent=145 // pred_region
          %s584 = sand.u32 %s71, 1
          %s585 = sand.u32 %s71, 1
          %s586 = smul.addr %s585, 16
          %s587 = scalar_lea.vmem [#allocation3], %s586
        $region150: #{part_iwt3_forward.6} parent=145 // pred_fallthru
          _
        // Predicated region
        $region151: #{part_iwt3_forward.6} parent=145 // pred_check
          %p588 = pneg %p112
        $region152: #{part_iwt3_forward.6} parent=145 // pred_check_branch
          %590 = sbr.rel (%p588) target = $region154
        $region153: #{part_iwt3_forward.6} parent=145 // pred_region
          %s591 = sand.u32 %s97, 1
          %s592 = sand.u32 %s97, 1
          %s593 = smul.addr %s592, 16
          %s594 = scalar_lea.vmem [#allocation4], %s593
        $region154: #{part_iwt3_forward.6} parent=145 // pred_fallthru
          _
      $region146: #{part_iwt3_forward.6} parent=5 // pred_fallthru
        _
    $region6: #{part_iwt3_forward.6} parent=1 // loop_footer
      %s14 = sadd.s32 1, %s10
    $region7: #{part_iwt3_forward.6} parent=1 // loop_footer_branch
      %9 = sbr.rel target = $region3
    $region8: #{part_iwt3_forward.6} parent=1 // loop_exit
      _

// kernel: part_iwt3_forward.7
$region0: #{part_iwt3_forward.7}
  #allocation0 [shape = 'u32[]', space=smem, size = 0x4, offset = 0x4, fixed_abs, tag = 'smem constant byte address 0x4 - core index']
  #allocation1 [shape = 'u32[144,128]{1,0:T(1,128)}', space=vmem, size = 0x12000, scoped, tag = 'internal scratch']
  %s0 = inlined_call_operand.vmem [shape: bf16[16,512], index: 0, kind: input, shape index: {}]
  %s1 = inlined_call_operand.vmem [shape: f32[16,1], index: 1, kind: input, shape index: {}]
  %s2 = inlined_call_operand.vmem [shape: f32[16,1], index: 2, kind: input, shape index: {}]
  %s3 = inlined_call_operand.vmem [shape: bf16[16,512], index: 3, kind: output, shape index: {}]
  %s4 = sld [smem:[#allocation0]]
  $region117: #{part_iwt3_forward.7} parent=0
    _
  %s6 = ssub.s32 1, %s4
  %s7 = scalar_select 0, %s6, %s4
  $region1: #{part_iwt3_forward.7} parent=0
    #allocation2 [shape = 'u8[16384]{0}', space=vmem, size = 0x4000, scoped, tag = 'input window, operand 0']
    #allocation3 [shape = 'u8[16384]{0}', space=vmem, size = 0x4000, scoped, tag = 'output window, operand 0']
    loop: start=0, step=1, limit=4
    $region2: #{part_iwt3_forward.7} parent=1 // loop_pre_header
      _
    $region3: #{part_iwt3_forward.7} parent=1 // loop_header
      %s9 = sphi 0, %s13
      %p10 = scmp.ge.s32.totalorder %s9, 4
      %s19 = sphi 0, %s21
      %s22 = sphi 0, %s19
      %s23 = sphi 0, %s22
      %s39 = sphi 0, %s23
      %s43 = sphi 0, %s43
      %s45 = sphi 0, %s43
      %s46 = sphi 0, %s45
      %s60 = sphi 0, %s46
      %s64 = sphi 0, %s64
      %s66 = sphi 0, %s64
      %s67 = sphi 0, %s66
      %s81 = sphi 0, %s67
      %s87 = sphi 0, %s89
      %s90 = sphi 0, %s87
      %s91 = sphi 0, %s90
      %s107 = sphi 0, %s91
    $region4: #{part_iwt3_forward.7} parent=1 // loop_header_branch
      %12 = sbr.rel (%p10) target = $region8
    $region5: #{part_iwt3_forward.7} parent=1 // loop_body
      %s14 = ssub.s32 %s9, 1
      %s15 = ssub.s32 %s9, 2
      %s16 = sadd.s32 %s9, 1
      %s17 = ssub.s32 %s9, %s16
      %p18 = scmp.eq.s32.totalorder %s17, 0
      %s20 = sadd.s32 %s19, 1
      %s21 = scalar_select %p18, %s19, %s20
      %p24 = pneg %p18
      %p25 = scmp.eq.s32.totalorder %s9, 1
      %p26 = por %p24, %p25
      %p27 = scmp.ne.s32.totalorder %s19, %s22
      %p28 = scmp.eq.s32.totalorder %s9, 0
      %p29 = por %p27, %p28
      %p30 = scmp.ne.s32.totalorder %s19, %s22
      %p31 = scmp.eq.s32.totalorder %s14, 1
      %p32 = por %p30, %p31
      %p33 = scmp.ne.s32.totalorder %s22, %s23
      %p34 = scmp.eq.s32.totalorder %s14, 0
      %p35 = por %p33, %p34
      %p36 = scmp.ne.s32.totalorder %s22, %s23
      %p37 = scmp.eq.s32.totalorder %s15, 1
      %p38 = por %p36, %p37
      %p40 = scmp.ne.s32.totalorder %s23, %s39
      %p41 = scmp.eq.s32.totalorder %s15, 0
      %p42 = por %p40, %p41
      %s44 = sadd.s32 %s43, 1
      %p47 = scmp.eq.s32.totalorder %s9, 1
      %p48 = scmp.ne.s32.totalorder %s43, %s45
      %p49 = scmp.eq.s32.totalorder %s9, 0
      %p50 = por %p48, %p49
      %p51 = scmp.ne.s32.totalorder %s43, %s45
      %p52 = scmp.eq.s32.totalorder %s14, 1
      %p53 = por %p51, %p52
      %p54 = scmp.ne.s32.totalorder %s45, %s46
      %p55 = scmp.eq.s32.totalorder %s14, 0
      %p56 = por %p54, %p55
      %p57 = scmp.ne.s32.totalorder %s45, %s46
      %p58 = scmp.eq.s32.totalorder %s15, 1
      %p59 = por %p57, %p58
      %p61 = scmp.ne.s32.totalorder %s46, %s60
      %p62 = scmp.eq.s32.totalorder %s15, 0
      %p63 = por %p61, %p62
      %s65 = sadd.s32 %s64, 1
      %p68 = scmp.eq.s32.totalorder %s9, 1
      %p69 = scmp.ne.s32.totalorder %s64, %s66
      %p70 = scmp.eq.s32.totalorder %s9, 0
      %p71 = por %p69, %p70
      %p72 = scmp.ne.s32.totalorder %s64, %s66
      %p73 = scmp.eq.s32.totalorder %s14, 1
      %p74 = por %p72, %p73
      %p75 = scmp.ne.s32.totalorder %s66, %s67
      %p76 = scmp.eq.s32.totalorder %s14, 0
      %p77 = por %p75, %p76
      %p78 = scmp.ne.s32.totalorder %s66, %s67
      %p79 = scmp.eq.s32.totalorder %s15, 1
      %p80 = por %p78, %p79
      %p82 = scmp.ne.s32.totalorder %s67, %s81
      %p83 = scmp.eq.s32.totalorder %s15, 0
      %p84 = por %p82, %p83
      %s85 = ssub.s32 %s9, %s16
      %p86 = scmp.eq.s32.totalorder %s85, 0
      %s88 = sadd.s32 %s87, 1
      %s89 = scalar_select %p86, %s87, %s88
      %p92 = pneg %p86
      %p93 = scmp.eq.s32.totalorder %s9, 1
      %p94 = por %p92, %p93
      %p95 = scmp.ne.s32.totalorder %s87, %s90
      %p96 = scmp.eq.s32.totalorder %s9, 0
      %p97 = por %p95, %p96
      %p98 = scmp.ne.s32.totalorder %s87, %s90
      %p99 = scmp.eq.s32.totalorder %s14, 1
      %p100 = por %p98, %p99
      %p101 = scmp.ne.s32.totalorder %s90, %s91
      %p102 = scmp.eq.s32.totalorder %s14, 0
      %p103 = por %p101, %p102
      %p104 = scmp.ne.s32.totalorder %s90, %s91
      %p105 = scmp.eq.s32.totalorder %s15, 1
      %p106 = por %p104, %p105
      %p108 = scmp.ne.s32.totalorder %s91, %s107
      %p109 = scmp.eq.s32.totalorder %s15, 0
      %p110 = por %p108, %p109
      %p111 = scmp.le.s32.totalorder 1, %s9
      %p112 = scmp.lt.s32.totalorder %s9, 3
      %p113 = pnand %p111, %p112
      %p114 = pneg %p113
      // Predicated region
      $region9: #{part_iwt3_forward.7} parent=5 // pred_check
        _
      $region10: #{part_iwt3_forward.7} parent=5 // pred_check_branch
        %116 = sbr.rel (%p113) target = $region12
      $region11: #{part_iwt3_forward.7} parent=5 // pred_region
        %s117 = ssub.s32 %s9, 1
        // Predicated region
        $region13: #{part_iwt3_forward.7} parent=11 // pred_check
          %p118 = pneg %p56
        $region14: #{part_iwt3_forward.7} parent=11 // pred_check_branch
          %120 = sbr.rel (%p118) target = $region16
        $region15: #{part_iwt3_forward.7} parent=11 // pred_region
          _
        $region16: #{part_iwt3_forward.7} parent=11 // pred_fallthru
          _
        // Predicated region
        $region17: #{part_iwt3_forward.7} parent=11 // pred_check
          %p121 = pneg %p77
        $region18: #{part_iwt3_forward.7} parent=11 // pred_check_branch
          %123 = sbr.rel (%p121) target = $region20
        $region19: #{part_iwt3_forward.7} parent=11 // pred_region
          _
        $region20: #{part_iwt3_forward.7} parent=11 // pred_fallthru
          _
      $region12: #{part_iwt3_forward.7} parent=5 // pred_fallthru
        _
      %p124 = scmp.lt.s32.totalorder %s9, 2
      // Predicated region
      $region21: #{part_iwt3_forward.7} parent=5 // pred_check
        %p125 = pneg %p124
      $region22: #{part_iwt3_forward.7} parent=5 // pred_check_branch
        %127 = sbr.rel (%p125) target = $region24
      $region23: #{part_iwt3_forward.7} parent=5 // pred_region
        // Predicated region
        $region25: #{part_iwt3_forward.7} parent=23 // pred_check
          %p128 = pneg %p29
        $region26: #{part_iwt3_forward.7} parent=23 // pred_check_branch
          %130 = sbr.rel (%p128) target = $region28
        $region27: #{part_iwt3_forward.7} parent=23 // pred_region
          %s131 = sand.u32 %s19, 1
          %s132 = sand.u32 %s19, 1
          %s133 = smul.addr %s132, 16
          %s134 = scalar_lea.vmem [#allocation2], %s133
          %s135 = smul.u32 2, %s9
          %s136 = smul.addr %s135, 4
          %s137 = scalar_lea.vmem %s0, %s136
          // Predicated region
          $region29: #{part_iwt3_forward.7} parent=27 // pred_check
            _
          $region30: #{part_iwt3_forward.7} parent=27 // pred_check_branch
            %139 = sbr.rel (0) target = $region32
          $region31: #{part_iwt3_forward.7} parent=27 // pred_region
            // Predicated region
            $region33: #{part_iwt3_forward.7} parent=31 // pred_check
              _
            $region34: #{part_iwt3_forward.7} parent=31 // pred_check_branch
              %141 = sbr.rel (0) target = $region36
            $region35: #{part_iwt3_forward.7} parent=31 // pred_region
              // Predicated region
              $region48: #{part_iwt3_forward.7} parent=35 // pred_check
                _
              $region49: #{part_iwt3_forward.7} parent=35 // pred_check_branch
                %159 = sbr.rel (0) target = $region51
              $region50: #{part_iwt3_forward.7} parent=35 // pred_region
                loop: start=0, step=1, limit=1
                $region52: #{part_iwt3_forward.7} parent=50 // loop_pre_header
                  _
                $region53: #{part_iwt3_forward.7} parent=50 // loop_header
                  %s161 = sphi 0, %s165
                  %p162 = scmp.ge.s32.totalorder %s161, 1
                  %s166 = sphi %s137, %s137
                  %s167 = sphi %s134, %s134
                $region54: #{part_iwt3_forward.7} parent=50 // loop_header_branch
                  %164 = sbr.rel (%p162) target = $region58
                $region55: #{part_iwt3_forward.7} parent=50 // loop_body
                  %v168 = vld [vmem:[%s166] sm:$0xff]
                  %169 = vst [vmem:[%s167] sm:$0xff] %v168
                  %v170 = vld [vmem:[%s166 + $0x10] sm:$0xff]
                  %171 = vst [vmem:[%s167 + $0x8] sm:$0xff] %v170
                $region56: #{part_iwt3_forward.7} parent=50 // loop_footer
                  %s165 = sadd.s32 1, %s161
                $region57: #{part_iwt3_forward.7} parent=50 // loop_footer_branch
                  %160 = sbr.rel target = $region53
                $region58: #{part_iwt3_forward.7} parent=50 // loop_exit
                  _
              $region51: #{part_iwt3_forward.7} parent=35 // pred_fallthru
                _
              // Predicated region
              $region59: #{part_iwt3_forward.7} parent=35 // pred_check
                _
              $region60: #{part_iwt3_forward.7} parent=35 // pred_check_branch
                %173 = sbr.rel target = $region62
              $region61: #{part_iwt3_forward.7} parent=35 // pred_region
                _
              $region62: #{part_iwt3_forward.7} parent=35 // pred_fallthru
                _
            $region36: #{part_iwt3_forward.7} parent=31 // pred_fallthru
              _
            // Predicated region
            $region37: #{part_iwt3_forward.7} parent=31 // pred_check
              _
            $region38: #{part_iwt3_forward.7} parent=31 // pred_check_branch
              %143 = sbr.rel target = $region40
            $region39: #{part_iwt3_forward.7} parent=31 // pred_region
              %s145 = ssub.s32 256, 1
              loop: start=0, step=1, limit=1
              $region41: #{part_iwt3_forward.7} parent=39 // loop_pre_header
                _
              $region42: #{part_iwt3_forward.7} parent=39 // loop_header
                %s147 = sphi 0, %s151
                %p148 = scmp.ge.s32.totalorder %s147, 1
                %s152 = sphi %s137, %s137
                %s153 = sphi %s134, %s134
              $region43: #{part_iwt3_forward.7} parent=39 // loop_header_branch
                %150 = sbr.rel (%p148) target = $region47
              $region44: #{part_iwt3_forward.7} parent=39 // loop_body
                %v154 = vld [vmem:[%s152] sm:%s145]
                %155 = vst [vmem:[%s153] sm:%s145] %v154
                %v156 = vld [vmem:[%s152 + $0x10] sm:%s145]
                %157 = vst [vmem:[%s153 + $0x8] sm:%s145] %v156
              $region45: #{part_iwt3_forward.7} parent=39 // loop_footer
                %s151 = sadd.s32 1, %s147
              $region46: #{part_iwt3_forward.7} parent=39 // loop_footer_branch
                %146 = sbr.rel target = $region42
              $region47: #{part_iwt3_forward.7} parent=39 // loop_exit
                _
            $region40: #{part_iwt3_forward.7} parent=31 // pred_fallthru
              _
          $region32: #{part_iwt3_forward.7} parent=27 // pred_fallthru
            _
          %174 = vnop
        $region28: #{part_iwt3_forward.7} parent=23 // pred_fallthru
          _
      $region24: #{part_iwt3_forward.7} parent=5 // pred_fallthru
        _
      %p175 = scmp.le.s32.totalorder 1, %s9
      %p176 = scmp.lt.s32.totalorder %s9, 3
      %p177 = pnand %p175, %p176
      %p178 = pneg %p177
      // Predicated region
      $region63: #{part_iwt3_forward.7} parent=5 // pred_check
        _
      $region64: #{part_iwt3_forward.7} parent=5 // pred_check_branch
        %180 = sbr.rel (%p177) target = $region66
      $region65: #{part_iwt3_forward.7} parent=5 // pred_region
        %s181 = ssub.s32 %s9, 1
        %s182 = sand.u32 %s22, 1
        %s183 = sand.u32 %s22, 1
        %s184 = smul.addr %s183, 16
        %s185 = scalar_lea.vmem [#allocation2], %s184
        // Predicated region
        $region67: #{part_iwt3_forward.7} parent=65 // pred_check
          %p186 = pneg %p35
        $region68: #{part_iwt3_forward.7} parent=65 // pred_check_branch
          %188 = sbr.rel (%p186) target = $region70
        $region69: #{part_iwt3_forward.7} parent=65 // pred_region
          _
        $region70: #{part_iwt3_forward.7} parent=65 // pred_fallthru
          _
        %s189 = sand.u32 %s22, 1
        %s190 = sand.u32 %s22, 1
        %s191 = smul.addr %s190, 16
        %s192 = scalar_lea.vmem [#allocation2], %s191
        %p193 = pneg %p35
        %p194 = pneg %p32
        %p195 = pneg %p56
        %p196 = pneg %p53
        %p197 = pneg %p77
        %p198 = pneg %p74
        %p199 = pneg %p103
        %p200 = pneg %p100
        %s201 = sand.u32 %s90, 1
        %s202 = sand.u32 %s90, 1
        %s203 = smul.addr %s202, 16
        %s204 = scalar_lea.vmem [#allocation3], %s203
        %s205 = smul.u32 2, %s14
        %s206 = smul.u32 2, %s14
        %v207 = vld [vmem:[%s185] sm:$0xff]
        %v208 = vld [vmem:[%s185 + $0x8] sm:$0xff]
        %v209 = vunpack.c.l.bf16 %v207
        %v210 = vunpack.c.h.bf16 %v207
        %v211 = vunpack.c.l.bf16 %v208
        %v212 = vunpack.c.h.bf16 %v208
        %v213 = vld [vmem:[%s1] sm:$0xff]
        %v214 = vld [vmem:[%s1 + $0x8] sm:$0xff]
        %216 = vset.pattern.permute.xlu0 0
        %217 = vperm.xlu0 %216, %v213
        %v218 = vpop.permute.xlu0 %217
        %221 = vset.pattern.permute.xlu0 0
        %222 = vperm.xlu0 %221, %v214
        %v223 = vpop.permute.xlu0 %222
        %v225 = vmul.f32 %v209, %v218
        %v226 = vmul.f32 %v210, %v218
        %v227 = vmul.f32 %v211, %v223
        %v228 = vmul.f32 %v212, %v223
        %v229 = vld [vmem:[%s2] sm:$0xff]
        %v230 = vld [vmem:[%s2 + $0x8] sm:$0xff]
        %232 = vset.pattern.permute.xlu0 0
        %233 = vperm.xlu0 %232, %v229
        %v234 = vpop.permute.xlu0 %233
        %237 = vset.pattern.permute.xlu0 0
        %238 = vperm.xlu0 %237, %v230
        %v239 = vpop.permute.xlu0 %238
        %v241 = vadd.f32 %v225, %v234
        %v242 = vadd.f32 %v226, %v234
        %v243 = vadd.f32 %v227, %v239
        %v244 = vadd.f32 %v228, %v239
        %v245 = vmax.f32 %v241, 0.0
        %v246 = vmax.f32 %v242, 0.0
        %v247 = vmax.f32 %v243, 0.0
        %v248 = vmax.f32 %v244, 0.0
        %v249 = vpack.c.bf16 %v247, %v245
        %v250 = vpack.c.bf16 %v248, %v246
        %v253 = vunpack.c.l.b16 %v249
        %v254 = vunpack.c.l.b16 %v250
        %v255 = vunpack.c.h.b16 %v249
        %v256 = vunpack.c.h.b16 %v250
        %v257 = vpack.c.b16 %v254, %v253
        %v258 = vpack.c.b16 %v256, %v255
        %261 = vst [vmem:[%s204] sm:$0xff] %v257
        %262 = vst [vmem:[%s204 + $0x8] sm:$0xff] %v258
        %s263 = sand.u32 %s90, 1
        %s264 = sand.u32 %s90, 1
        %s265 = smul.addr %s264, 16
        %s266 = scalar_lea.vmem [#allocation3], %s265
        // Predicated region
        $region71: #{part_iwt3_forward.7} parent=65 // pred_check
          %p267 = pneg %p100
        $region72: #{part_iwt3_forward.7} parent=65 // pred_check_branch
          %269 = sbr.rel (%p267) target = $region74
        $region73: #{part_iwt3_forward.7} parent=65 // pred_region
          %s270 = smul.u32 2, %s14
          %s271 = smul.addr %s270, 4
          %s272 = scalar_lea.vmem %s3, %s271
          // Predicated region
          $region75: #{part_iwt3_forward.7} parent=73 // pred_check
            _
          $region76: #{part_iwt3_forward.7} parent=73 // pred_check_branch
            %274 = sbr.rel (0) target = $region78
          $region77: #{part_iwt3_forward.7} parent=73 // pred_region
            // Predicated region
            $region79: #{part_iwt3_forward.7} parent=77 // pred_check
              _
            $region80: #{part_iwt3_forward.7} parent=77 // pred_check_branch
              %276 = sbr.rel (0) target = $region82
            $region81: #{part_iwt3_forward.7} parent=77 // pred_region
              // Predicated region
              $region94: #{part_iwt3_forward.7} parent=81 // pred_check
                _
              $region95: #{part_iwt3_forward.7} parent=81 // pred_check_branch
                %294 = sbr.rel (0) target = $region97
              $region96: #{part_iwt3_forward.7} parent=81 // pred_region
                loop: start=0, step=1, limit=1
                $region98: #{part_iwt3_forward.7} parent=96 // loop_pre_header
                  _
                $region99: #{part_iwt3_forward.7} parent=96 // loop_header
                  %s296 = sphi 0, %s300
                  %p297 = scmp.ge.s32.totalorder %s296, 1
                  %s301 = sphi %s266, %s266
                  %s302 = sphi %s272, %s272
                $region100: #{part_iwt3_forward.7} parent=96 // loop_header_branch
                  %299 = sbr.rel (%p297) target = $region104
                $region101: #{part_iwt3_forward.7} parent=96 // loop_body
                  %v303 = vld [vmem:[%s301] sm:$0xff]
                  %304 = vst [vmem:[%s302] sm:$0xff] %v303
                  %v305 = vld [vmem:[%s301 + $0x8] sm:$0xff]
                  %306 = vst [vmem:[%s302 + $0x10] sm:$0xff] %v305
                $region102: #{part_iwt3_forward.7} parent=96 // loop_footer
                  %s300 = sadd.s32 1, %s296
                $region103: #{part_iwt3_forward.7} parent=96 // loop_footer_branch
                  %295 = sbr.rel target = $region99
                $region104: #{part_iwt3_forward.7} parent=96 // loop_exit
                  _
              $region97: #{part_iwt3_forward.7} parent=81 // pred_fallthru
                _
              // Predicated region
              $region105: #{part_iwt3_forward.7} parent=81 // pred_check
                _
              $region106: #{part_iwt3_forward.7} parent=81 // pred_check_branch
                %308 = sbr.rel target = $region108
              $region107: #{part_iwt3_forward.7} parent=81 // pred_region
                _
              $region108: #{part_iwt3_forward.7} parent=81 // pred_fallthru
                _
            $region82: #{part_iwt3_forward.7} parent=77 // pred_fallthru
              _
            // Predicated region
            $region83: #{part_iwt3_forward.7} parent=77 // pred_check
              _
            $region84: #{part_iwt3_forward.7} parent=77 // pred_check_branch
              %278 = sbr.rel target = $region86
            $region85: #{part_iwt3_forward.7} parent=77 // pred_region
              %s280 = ssub.s32 256, 1
              loop: start=0, step=1, limit=1
              $region87: #{part_iwt3_forward.7} parent=85 // loop_pre_header
                _
              $region88: #{part_iwt3_forward.7} parent=85 // loop_header
                %s282 = sphi 0, %s286
                %p283 = scmp.ge.s32.totalorder %s282, 1
                %s287 = sphi %s266, %s266
                %s288 = sphi %s272, %s272
              $region89: #{part_iwt3_forward.7} parent=85 // loop_header_branch
                %285 = sbr.rel (%p283) target = $region93
              $region90: #{part_iwt3_forward.7} parent=85 // loop_body
                %v289 = vld [vmem:[%s287] sm:%s280]
                %290 = vst [vmem:[%s288] sm:%s280] %v289
                %v291 = vld [vmem:[%s287 + $0x8] sm:%s280]
                %292 = vst [vmem:[%s288 + $0x10] sm:%s280] %v291
              $region91: #{part_iwt3_forward.7} parent=85 // loop_footer
                %s286 = sadd.s32 1, %s282
              $region92: #{part_iwt3_forward.7} parent=85 // loop_footer_branch
                %281 = sbr.rel target = $region88
              $region93: #{part_iwt3_forward.7} parent=85 // loop_exit
                _
            $region86: #{part_iwt3_forward.7} parent=77 // pred_fallthru
              _
          $region78: #{part_iwt3_forward.7} parent=73 // pred_fallthru
            _
          %309 = vnop
        $region74: #{part_iwt3_forward.7} parent=65 // pred_fallthru
          _
      $region66: #{part_iwt3_forward.7} parent=5 // pred_fallthru
        _
      %p310 = scmp.le.s32.totalorder 2, %s9
      // Predicated region
      $region109: #{part_iwt3_forward.7} parent=5 // pred_check
        %p311 = pneg %p310
      $region110: #{part_iwt3_forward.7} parent=5 // pred_check_branch
        %313 = sbr.rel (%p311) target = $region112
      $region111: #{part_iwt3_forward.7} parent=5 // pred_region
        %s314 = ssub.s32 %s9, 2
        // Predicated region
        $region113: #{part_iwt3_forward.7} parent=111 // pred_check
          %p315 = pneg %p106
        $region114: #{part_iwt3_forward.7} parent=111 // pred_check_branch
          %317 = sbr.rel (%p315) target = $region116
        $region115: #{part_iwt3_forward.7} parent=111 // pred_region
          %s318 = sand.u32 %s91, 1
          %s319 = sand.u32 %s91, 1
          %s320 = smul.addr %s319, 16
          %s321 = scalar_lea.vmem [#allocation3], %s320
        $region116: #{part_iwt3_forward.7} parent=111 // pred_fallthru
          _
      $region112: #{part_iwt3_forward.7} parent=5 // pred_fallthru
        _
    $region6: #{part_iwt3_forward.7} parent=1 // loop_footer
      %s13 = sadd.s32 1, %s9
    $region7: #{part_iwt3_forward.7} parent=1 // loop_footer_branch
      %8 = sbr.rel target = $region3
    $region8: #{part_iwt3_forward.7} parent=1 // loop_exit
      _

// kernel: part_iwt3_forward.9
$region0: #{part_iwt3_forward.9}
  #allocation0 [shape = 'u32[]', space=smem, size = 0x4, offset = 0x4, fixed_abs, tag = 'smem constant byte address 0x4 - core index']
  #allocation1 [shape = 'u32[144,128]{1,0:T(1,128)}', space=vmem, size = 0x12000, scoped, tag = 'internal scratch']
  %s0 = inlined_call_operand.vmem [shape: bf16[16,512], index: 0, kind: input, shape index: {}]
  %s1 = inlined_call_operand.vmem [shape: f32[16,1], index: 1, kind: input, shape index: {}]
  %s2 = inlined_call_operand.vmem [shape: f32[16,1], index: 2, kind: input, shape index: {}]
  %s3 = inlined_call_operand.vmem [shape: f32[16,512], index: 3, kind: output, shape index: {}]
  %s4 = sld [smem:[#allocation0]]
  $region102: #{part_iwt3_forward.9} parent=0
    _
  %s6 = ssub.s32 1, %s4
  %s7 = scalar_select 0, %s6, %s4
  $region1: #{part_iwt3_forward.9} parent=0
    #allocation2 [shape = 'u8[16384]{0}', space=vmem, size = 0x4000, scoped, tag = 'input window, operand 0']
    #allocation3 [shape = 'u8[32768]{0}', space=vmem, size = 0x8000, scoped, tag = 'output window, operand 0']
    loop: start=0, step=1, limit=4
    $region2: #{part_iwt3_forward.9} parent=1 // loop_pre_header
      _
    $region3: #{part_iwt3_forward.9} parent=1 // loop_header
      %s9 = sphi 0, %s13
      %p10 = scmp.ge.s32.totalorder %s9, 4
      %s19 = sphi 0, %s21
      %s22 = sphi 0, %s19
      %s23 = sphi 0, %s22
      %s39 = sphi 0, %s23
      %s43 = sphi 0, %s43
      %s45 = sphi 0, %s43
      %s46 = sphi 0, %s45
      %s60 = sphi 0, %s46
      %s64 = sphi 0, %s64
      %s66 = sphi 0, %s64
      %s67 = sphi 0, %s66
      %s81 = sphi 0, %s67
      %s87 = sphi 0, %s89
      %s90 = sphi 0, %s87
      %s91 = sphi 0, %s90
      %s107 = sphi 0, %s91
    $region4: #{part_iwt3_forward.9} parent=1 // loop_header_branch
      %12 = sbr.rel (%p10) target = $region8
    $region5: #{part_iwt3_forward.9} parent=1 // loop_body
      %s14 = ssub.s32 %s9, 1
      %s15 = ssub.s32 %s9, 2
      %s16 = sadd.s32 %s9, 1
      %s17 = ssub.s32 %s9, %s16
      %p18 = scmp.eq.s32.totalorder %s17, 0
      %s20 = sadd.s32 %s19, 1
      %s21 = scalar_select %p18, %s19, %s20
      %p24 = pneg %p18
      %p25 = scmp.eq.s32.totalorder %s9, 1
      %p26 = por %p24, %p25
      %p27 = scmp.ne.s32.totalorder %s19, %s22
      %p28 = scmp.eq.s32.totalorder %s9, 0
      %p29 = por %p27, %p28
      %p30 = scmp.ne.s32.totalorder %s19, %s22
      %p31 = scmp.eq.s32.totalorder %s14, 1
      %p32 = por %p30, %p31
      %p33 = scmp.ne.s32.totalorder %s22, %s23
      %p34 = scmp.eq.s32.totalorder %s14, 0
      %p35 = por %p33, %p34
      %p36 = scmp.ne.s32.totalorder %s22, %s23
      %p37 = scmp.eq.s32.totalorder %s15, 1
      %p38 = por %p36, %p37
      %p40 = scmp.ne.s32.totalorder %s23, %s39
      %p41 = scmp.eq.s32.totalorder %s15, 0
      %p42 = por %p40, %p41
      %s44 = sadd.s32 %s43, 1
      %p47 = scmp.eq.s32.totalorder %s9, 1
      %p48 = scmp.ne.s32.totalorder %s43, %s45
      %p49 = scmp.eq.s32.totalorder %s9, 0
      %p50 = por %p48, %p49
      %p51 = scmp.ne.s32.totalorder %s43, %s45
      %p52 = scmp.eq.s32.totalorder %s14, 1
      %p53 = por %p51, %p52
      %p54 = scmp.ne.s32.totalorder %s45, %s46
      %p55 = scmp.eq.s32.totalorder %s14, 0
      %p56 = por %p54, %p55
      %p57 = scmp.ne.s32.totalorder %s45, %s46
      %p58 = scmp.eq.s32.totalorder %s15, 1
      %p59 = por %p57, %p58
      %p61 = scmp.ne.s32.totalorder %s46, %s60
      %p62 = scmp.eq.s32.totalorder %s15, 0
      %p63 = por %p61, %p62
      %s65 = sadd.s32 %s64, 1
      %p68 = scmp.eq.s32.totalorder %s9, 1
      %p69 = scmp.ne.s32.totalorder %s64, %s66
      %p70 = scmp.eq.s32.totalorder %s9, 0
      %p71 = por %p69, %p70
      %p72 = scmp.ne.s32.totalorder %s64, %s66
      %p73 = scmp.eq.s32.totalorder %s14, 1
      %p74 = por %p72, %p73
      %p75 = scmp.ne.s32.totalorder %s66, %s67
      %p76 = scmp.eq.s32.totalorder %s14, 0
      %p77 = por %p75, %p76
      %p78 = scmp.ne.s32.totalorder %s66, %s67
      %p79 = scmp.eq.s32.totalorder %s15, 1
      %p80 = por %p78, %p79
      %p82 = scmp.ne.s32.totalorder %s67, %s81
      %p83 = scmp.eq.s32.totalorder %s15, 0
      %p84 = por %p82, %p83
      %s85 = ssub.s32 %s9, %s16
      %p86 = scmp.eq.s32.totalorder %s85, 0
      %s88 = sadd.s32 %s87, 1
      %s89 = scalar_select %p86, %s87, %s88
      %p92 = pneg %p86
      %p93 = scmp.eq.s32.totalorder %s9, 1
      %p94 = por %p92, %p93
      %p95 = scmp.ne.s32.totalorder %s87, %s90
      %p96 = scmp.eq.s32.totalorder %s9, 0
      %p97 = por %p95, %p96
      %p98 = scmp.ne.s32.totalorder %s87, %s90
      %p99 = scmp.eq.s32.totalorder %s14, 1
      %p100 = por %p98, %p99
      %p101 = scmp.ne.s32.totalorder %s90, %s91
      %p102 = scmp.eq.s32.totalorder %s14, 0
      %p103 = por %p101, %p102
      %p104 = scmp.ne.s32.totalorder %s90, %s91
      %p105 = scmp.eq.s32.totalorder %s15, 1
      %p106 = por %p104, %p105
      %p108 = scmp.ne.s32.totalorder %s91, %s107
      %p109 = scmp.eq.s32.totalorder %s15, 0
      %p110 = por %p108, %p109
      %p111 = scmp.le.s32.totalorder 1, %s9
      %p112 = scmp.lt.s32.totalorder %s9, 3
      %p113 = pnand %p111, %p112
      %p114 = pneg %p113
      // Predicated region
      $region9: #{part_iwt3_forward.9} parent=5 // pred_check
        _
      $region10: #{part_iwt3_forward.9} parent=5 // pred_check_branch
        %116 = sbr.rel (%p113) target = $region12
      $region11: #{part_iwt3_forward.9} parent=5 // pred_region
        %s117 = ssub.s32 %s9, 1
        // Predicated region
        $region13: #{part_iwt3_forward.9} parent=11 // pred_check
          %p118 = pneg %p56
        $region14: #{part_iwt3_forward.9} parent=11 // pred_check_branch
          %120 = sbr.rel (%p118) target = $region16
        $region15: #{part_iwt3_forward.9} parent=11 // pred_region
          _
        $region16: #{part_iwt3_forward.9} parent=11 // pred_fallthru
          _
        // Predicated region
        $region17: #{part_iwt3_forward.9} parent=11 // pred_check
          %p121 = pneg %p77
        $region18: #{part_iwt3_forward.9} parent=11 // pred_check_branch
          %123 = sbr.rel (%p121) target = $region20
        $region19: #{part_iwt3_forward.9} parent=11 // pred_region
          _
        $region20: #{part_iwt3_forward.9} parent=11 // pred_fallthru
          _
      $region12: #{part_iwt3_forward.9} parent=5 // pred_fallthru
        _
      %p124 = scmp.lt.s32.totalorder %s9, 2
      // Predicated region
      $region21: #{part_iwt3_forward.9} parent=5 // pred_check
        %p125 = pneg %p124
      $region22: #{part_iwt3_forward.9} parent=5 // pred_check_branch
        %127 = sbr.rel (%p125) target = $region24
      $region23: #{part_iwt3_forward.9} parent=5 // pred_region
        // Predicated region
        $region25: #{part_iwt3_forward.9} parent=23 // pred_check
          %p128 = pneg %p29
        $region26: #{part_iwt3_forward.9} parent=23 // pred_check_branch
          %130 = sbr.rel (%p128) target = $region28
        $region27: #{part_iwt3_forward.9} parent=23 // pred_region
          %s131 = sand.u32 %s19, 1
          %s132 = sand.u32 %s19, 1
          %s133 = smul.addr %s132, 16
          %s134 = scalar_lea.vmem [#allocation2], %s133
          %s135 = smul.u32 2, %s9
          %s136 = smul.addr %s135, 4
          %s137 = scalar_lea.vmem %s0, %s136
          // Predicated region
          $region29: #{part_iwt3_forward.9} parent=27 // pred_check
            _
          $region30: #{part_iwt3_forward.9} parent=27 // pred_check_branch
            %139 = sbr.rel (0) target = $region32
          $region31: #{part_iwt3_forward.9} parent=27 // pred_region
            // Predicated region
            $region33: #{part_iwt3_forward.9} parent=31 // pred_check
              _
            $region34: #{part_iwt3_forward.9} parent=31 // pred_check_branch
              %141 = sbr.rel (0) target = $region36
            $region35: #{part_iwt3_forward.9} parent=31 // pred_region
              // Predicated region
              $region48: #{part_iwt3_forward.9} parent=35 // pred_check
                _
              $region49: #{part_iwt3_forward.9} parent=35 // pred_check_branch
                %159 = sbr.rel (0) target = $region51
              $region50: #{part_iwt3_forward.9} parent=35 // pred_region
                loop: start=0, step=1, limit=1
                $region52: #{part_iwt3_forward.9} parent=50 // loop_pre_header
                  _
                $region53: #{part_iwt3_forward.9} parent=50 // loop_header
                  %s161 = sphi 0, %s165
                  %p162 = scmp.ge.s32.totalorder %s161, 1
                  %s166 = sphi %s137, %s137
                  %s167 = sphi %s134, %s134
                $region54: #{part_iwt3_forward.9} parent=50 // loop_header_branch
                  %164 = sbr.rel (%p162) target = $region58
                $region55: #{part_iwt3_forward.9} parent=50 // loop_body
                  %v168 = vld [vmem:[%s166] sm:$0xff]
                  %169 = vst [vmem:[%s167] sm:$0xff] %v168
                  %v170 = vld [vmem:[%s166 + $0x10] sm:$0xff]
                  %171 = vst [vmem:[%s167 + $0x8] sm:$0xff] %v170
                $region56: #{part_iwt3_forward.9} parent=50 // loop_footer
                  %s165 = sadd.s32 1, %s161
                $region57: #{part_iwt3_forward.9} parent=50 // loop_footer_branch
                  %160 = sbr.rel target = $region53
                $region58: #{part_iwt3_forward.9} parent=50 // loop_exit
                  _
              $region51: #{part_iwt3_forward.9} parent=35 // pred_fallthru
                _
              // Predicated region
              $region59: #{part_iwt3_forward.9} parent=35 // pred_check
                _
              $region60: #{part_iwt3_forward.9} parent=35 // pred_check_branch
                %173 = sbr.rel target = $region62
              $region61: #{part_iwt3_forward.9} parent=35 // pred_region
                _
              $region62: #{part_iwt3_forward.9} parent=35 // pred_fallthru
                _
            $region36: #{part_iwt3_forward.9} parent=31 // pred_fallthru
              _
            // Predicated region
            $region37: #{part_iwt3_forward.9} parent=31 // pred_check
              _
            $region38: #{part_iwt3_forward.9} parent=31 // pred_check_branch
              %143 = sbr.rel target = $region40
            $region39: #{part_iwt3_forward.9} parent=31 // pred_region
              %s145 = ssub.s32 256, 1
              loop: start=0, step=1, limit=1
              $region41: #{part_iwt3_forward.9} parent=39 // loop_pre_header
                _
              $region42: #{part_iwt3_forward.9} parent=39 // loop_header
                %s147 = sphi 0, %s151
                %p148 = scmp.ge.s32.totalorder %s147, 1
                %s152 = sphi %s137, %s137
                %s153 = sphi %s134, %s134
              $region43: #{part_iwt3_forward.9} parent=39 // loop_header_branch
                %150 = sbr.rel (%p148) target = $region47
              $region44: #{part_iwt3_forward.9} parent=39 // loop_body
                %v154 = vld [vmem:[%s152] sm:%s145]
                %155 = vst [vmem:[%s153] sm:%s145] %v154
                %v156 = vld [vmem:[%s152 + $0x10] sm:%s145]
                %157 = vst [vmem:[%s153 + $0x8] sm:%s145] %v156
              $region45: #{part_iwt3_forward.9} parent=39 // loop_footer
                %s151 = sadd.s32 1, %s147
              $region46: #{part_iwt3_forward.9} parent=39 // loop_footer_branch
                %146 = sbr.rel target = $region42
              $region47: #{part_iwt3_forward.9} parent=39 // loop_exit
                _
            $region40: #{part_iwt3_forward.9} parent=31 // pred_fallthru
              _
          $region32: #{part_iwt3_forward.9} parent=27 // pred_fallthru
            _
          %174 = vnop
        $region28: #{part_iwt3_forward.9} parent=23 // pred_fallthru
          _
      $region24: #{part_iwt3_forward.9} parent=5 // pred_fallthru
        _
      %p175 = scmp.le.s32.totalorder 1, %s9
      %p176 = scmp.lt.s32.totalorder %s9, 3
      %p177 = pnand %p175, %p176
      %p178 = pneg %p177
      // Predicated region
      $region63: #{part_iwt3_forward.9} parent=5 // pred_check
        _
      $region64: #{part_iwt3_forward.9} parent=5 // pred_check_branch
        %180 = sbr.rel (%p177) target = $region66
      $region65: #{part_iwt3_forward.9} parent=5 // pred_region
        %s181 = ssub.s32 %s9, 1
        %s182 = sand.u32 %s22, 1
        %s183 = sand.u32 %s22, 1
        %s184 = smul.addr %s183, 16
        %s185 = scalar_lea.vmem [#allocation2], %s184
        // Predicated region
        $region67: #{part_iwt3_forward.9} parent=65 // pred_check
          %p186 = pneg %p35
        $region68: #{part_iwt3_forward.9} parent=65 // pred_check_branch
          %188 = sbr.rel (%p186) target = $region70
        $region69: #{part_iwt3_forward.9} parent=65 // pred_region
          _
        $region70: #{part_iwt3_forward.9} parent=65 // pred_fallthru
          _
        %s189 = sand.u32 %s22, 1
        %s190 = sand.u32 %s22, 1
        %s191 = smul.addr %s190, 16
        %s192 = scalar_lea.vmem [#allocation2], %s191
        %p193 = pneg %p35
        %p194 = pneg %p32
        %p195 = pneg %p56
        %p196 = pneg %p53
        %p197 = pneg %p77
        %p198 = pneg %p74
        %p199 = pneg %p103
        %p200 = pneg %p100
        %s201 = sand.u32 %s90, 1
        %s202 = sand.u32 %s90, 1
        %s203 = smul.addr %s202, 32
        %s204 = scalar_lea.vmem [#allocation3], %s203
        %s205 = smul.u32 2, %s14
        %s206 = smul.u32 2, %s14
        %v207 = vld [vmem:[%s185] sm:$0xff]
        %v208 = vld [vmem:[%s185 + $0x8] sm:$0xff]
        %v209 = vunpack.c.l.bf16 %v207
        %v210 = vunpack.c.h.bf16 %v207
        %v211 = vunpack.c.l.bf16 %v208
        %v212 = vunpack.c.h.bf16 %v208
        %v213 = vld [vmem:[%s1] sm:$0xff]
        %v214 = vld [vmem:[%s1 + $0x8] sm:$0xff]
        %216 = vset.pattern.permute.xlu0 0
        %217 = vperm.xlu0 %216, %v213
        %v218 = vpop.permute.xlu0 %217
        %221 = vset.pattern.permute.xlu0 0
        %222 = vperm.xlu0 %221, %v214
        %v223 = vpop.permute.xlu0 %222
        %v225 = vmul.f32 %v209, %v218
        %v226 = vmul.f32 %v210, %v218
        %v227 = vmul.f32 %v211, %v223
        %v228 = vmul.f32 %v212, %v223
        %v229 = vld [vmem:[%s2] sm:$0xff]
        %v230 = vld [vmem:[%s2 + $0x8] sm:$0xff]
        %232 = vset.pattern.permute.xlu0 0
        %233 = vperm.xlu0 %232, %v229
        %v234 = vpop.permute.xlu0 %233
        %237 = vset.pattern.permute.xlu0 0
        %238 = vperm.xlu0 %237, %v230
        %v239 = vpop.permute.xlu0 %238
        %v241 = vadd.f32 %v225, %v234
        %v242 = vadd.f32 %v226, %v234
        %v243 = vadd.f32 %v227, %v239
        %v244 = vadd.f32 %v228, %v239
        %v245 = vmax.f32 %v241, 0.0
        %v246 = vmax.f32 %v242, 0.0
        %v247 = vmax.f32 %v243, 0.0
        %v248 = vmax.f32 %v244, 0.0
        %249 = vst [vmem:[%s204] sm:$0xff] %v245
        %250 = vst [vmem:[%s204 + $0x8] sm:$0xff] %v246
        %251 = vst [vmem:[%s204 + $0x10] sm:$0xff] %v247
        %252 = vst [vmem:[%s204 + $0x18] sm:$0xff] %v248
        %s253 = sand.u32 %s90, 1
        %s254 = sand.u32 %s90, 1
        %s255 = smul.addr %s254, 32
        %s256 = scalar_lea.vmem [#allocation3], %s255
        // Predicated region
        $region71: #{part_iwt3_forward.9} parent=65 // pred_check
          %p257 = pneg %p100
        $region72: #{part_iwt3_forward.9} parent=65 // pred_check_branch
          %259 = sbr.rel (%p257) target = $region74
        $region73: #{part_iwt3_forward.9} parent=65 // pred_region
          %s260 = smul.u32 2, %s14
          %s261 = smul.addr %s260, 8
          %s262 = scalar_lea.vmem %s3, %s261
          // Predicated region
          $region75: #{part_iwt3_forward.9} parent=73 // pred_check
            _
          $region76: #{part_iwt3_forward.9} parent=73 // pred_check_branch
            %264 = sbr.rel (0) target = $region78
          $region77: #{part_iwt3_forward.9} parent=73 // pred_region
            // Predicated region
            $region79: #{part_iwt3_forward.9} parent=77 // pred_check
              _
            $region80: #{part_iwt3_forward.9} parent=77 // pred_check_branch
              %266 = sbr.rel (0) target = $region82
            $region81: #{part_iwt3_forward.9} parent=77 // pred_region
              loop: start=0, step=1, limit=1
              $region83: #{part_iwt3_forward.9} parent=81 // loop_pre_header
                _
              $region84: #{part_iwt3_forward.9} parent=81 // loop_header
                %s268 = sphi 0, %s272
                %p269 = scmp.ge.s32.totalorder %s268, 1
                %s273 = sphi %s256, %s256
                %s274 = sphi %s262, %s262
              $region85: #{part_iwt3_forward.9} parent=81 // loop_header_branch
                %271 = sbr.rel (%p269) target = $region89
              $region86: #{part_iwt3_forward.9} parent=81 // loop_body
                %v275 = vld [vmem:[%s273] sm:$0xff]
                %276 = vst [vmem:[%s274] sm:$0xff] %v275
                %v277 = vld [vmem:[%s273 + $0x8] sm:$0xff]
                %278 = vst [vmem:[%s274 + $0x8] sm:$0xff] %v277
                %v279 = vld [vmem:[%s273 + $0x10] sm:$0xff]
                %280 = vst [vmem:[%s274 + $0x20] sm:$0xff] %v279
                %v281 = vld [vmem:[%s273 + $0x18] sm:$0xff]
                %282 = vst [vmem:[%s274 + $0x28] sm:$0xff] %v281
              $region87: #{part_iwt3_forward.9} parent=81 // loop_footer
                %s272 = sadd.s32 1, %s268
              $region88: #{part_iwt3_forward.9} parent=81 // loop_footer_branch
                %267 = sbr.rel target = $region84
              $region89: #{part_iwt3_forward.9} parent=81 // loop_exit
                _
            $region82: #{part_iwt3_forward.9} parent=77 // pred_fallthru
              _
            // Predicated region
            $region90: #{part_iwt3_forward.9} parent=77 // pred_check
              _
            $region91: #{part_iwt3_forward.9} parent=77 // pred_check_branch
              %284 = sbr.rel target = $region93
            $region92: #{part_iwt3_forward.9} parent=77 // pred_region
              _
            $region93: #{part_iwt3_forward.9} parent=77 // pred_fallthru
              _
          $region78: #{part_iwt3_forward.9} parent=73 // pred_fallthru
            _
          %285 = vnop
        $region74: #{part_iwt3_forward.9} parent=65 // pred_fallthru
          _
      $region66: #{part_iwt3_forward.9} parent=5 // pred_fallthru
        _
      %p286 = scmp.le.s32.totalorder 2, %s9
      // Predicated region
      $region94: #{part_iwt3_forward.9} parent=5 // pred_check
        %p287 = pneg %p286
      $region95: #{part_iwt3_forward.9} parent=5 // pred_check_branch
        %289 = sbr.rel (%p287) target = $region97
      $region96: #{part_iwt3_forward.9} parent=5 // pred_region
        %s290 = ssub.s32 %s9, 2
        // Predicated region
        $region98: #{part_iwt3_forward.9} parent=96 // pred_check
          %p291 = pneg %p106
        $region99: #{part_iwt3_forward.9} parent=96 // pred_check_branch
          %293 = sbr.rel (%p291) target = $region101
        $region100: #{part_iwt3_forward.9} parent=96 // pred_region
          %s294 = sand.u32 %s91, 1
          %s295 = sand.u32 %s91, 1
          %s296 = smul.addr %s295, 32
          %s297 = scalar_lea.vmem [#allocation3], %s296
        $region101: #{part_iwt3_forward.9} parent=96 // pred_fallthru
          _
      $region97: #{part_iwt3_forward.9} parent=5 // pred_fallthru
        _
    $region6: #{part_iwt3_forward.9} parent=1 // loop_footer
      %s13 = sadd.s32 1, %s9
    $region7: #{part_iwt3_forward.9} parent=1 // loop_footer_branch
      %8 = sbr.rel target = $region3
    $region8: #{part_iwt3_forward.9} parent=1 // loop_exit
      _

</llo_original>
